<compile_context>
chip_gen: v7x
topology: tpu7x:2x2x1
jax: 0.10.0
libtpu: 0.0.40
codegen_flags: <defaults>
</compile_context>

<pallas_src>
import jax
import jax.numpy as jnp
from jax.experimental import pallas as pl
from jax.experimental.pallas import tpu as pltpu  # noqa: F401  (tiny kernel: no explicit VMEM/grid needed)


def gru_encode_kernel(ids_ref, len_ref, gtab_ref, whh_ref, bhn_ref, h_out_ref):
    """Single invocation: fused embed+input-proj prologue, then T unrolled GRU steps."""
    TB = ids_ref.shape[0]                 # T*B (time-major)
    V = gtab_ref.shape[0]
    B, H = h_out_ref.shape
    T = TB // B
    f32 = jnp.float32

    # ---- Prologue (independent of h, fully off the recurrent chain) --------
    # Exact one-hot gather of the fused embedding+input-projection table for
    # ALL timesteps in ONE matmul: (T*B, V) @ (V, 3H) -> (T*B, 3H).
    ids_col = ids_ref[...]                                        # (T*B, 1) int32
    iota_v = jax.lax.broadcasted_iota(jnp.int32, (TB, V), 1)
    onehot = (ids_col == iota_v).astype(f32)                      # (T*B, V), exact 1.0/0.0
    gi_all = jnp.dot(onehot, gtab_ref[...], preferred_element_type=f32)  # (T*B, 3H)

    whh = whh_ref[...]                                            # (H, 3H) hoisted once
    bhh_n = bhn_ref[...]                                          # (1, H)
    lens = len_ref[...]                                           # (B, 1) int32

    # ---- Recurrence: one (B,H)x(H,3H) matmul per unrolled step --------------
    h = jnp.zeros((B, H), f32)                                    # carry lives in vregs
    for t in range(T):                    # T static -> full unroll, static indices
        gi = gi_all[t * B:(t + 1) * B, :]                         # (B, 3H) static slice
        gh = jnp.dot(h, whh, preferred_element_type=f32)          # (B, 3H)

        # PyTorch gate order r, z, n.  b_ih (all gates) and b_hh (r, z) are
        # already folded into gi via gates_table; only b_hh_n remains.
        r = jax.nn.sigmoid(gi[:, 0:H] + gh[:, 0:H])
        z = jax.nn.sigmoid(gi[:, H:2 * H] + gh[:, H:2 * H])
        n = jnp.tanh(gi[:, 2 * H:] + r * (gh[:, 2 * H:] + bhh_n))

        h_new = n + z * (h - n)                                   # == (1-z)*n + z*h
        # pack_padded_sequence semantics: freeze h once t >= length[b].
        h = jnp.where(lens > t, h_new, h)

    h_out_ref[...] = h


def prepare_params(params):
    """One-time weight prep (kept OUT of the per-call jitted hot path).

    params: PyTorch-layout tensors — embedding (V, E), w_ih (3H, E),
    w_hh (3H, H), b_ih / b_hh (3H,), gate order r, z, n.
    """
    H = params["w_hh"].shape[1]
    emb = params["embedding"].astype(jnp.float32)                 # (V, E)
    w_ih_t = params["w_ih"].astype(jnp.float32).T                 # (E, 3H), cols r|z|n
    w_hh_t = params["w_hh"].astype(jnp.float32).T                 # (H, 3H), cols r|z|n
    b_ih = params["b_ih"].astype(jnp.float32)                     # (3H,)
    b_hh = params["b_hh"].astype(jnp.float32)                     # (3H,)

    # Fold b_ih (all gates) and b_hh (r, z gates) into the per-token table;
    # b_hh_n cannot be folded (it sits inside r * (...)).
    folded_bias = b_ih + jnp.concatenate(
        [b_hh[:2 * H], jnp.zeros((H,), jnp.float32)])
    gates_table = (
        jnp.dot(emb, w_ih_t, precision=jax.lax.Precision.HIGHEST) + folded_bias
    )                                                             # (V, 3H)

    return {
        "gates_table": gates_table,                               # (V, 3H)
        "w_hh_t": w_hh_t,                                         # (H, 3H)
        "b_hh_n": b_hh[2 * H:].reshape(1, H),                     # (1, H)
    }


@jax.jit
def sentence_encode(input_sents, lengths, prepped):
    """Mirror of SentenceEncoder.encode: sort desc by length, then embed + GRU
    over the packed (length-masked) sequence inside one Pallas kernel.
    num_layers=1 & unidirectional -> the .squeeze() branch, shape (B, H).
    Like the PyTorch module, the result stays in length-sorted order
    (encode() never un-permutes; dropout is not applied in encode())."""
    B, T = input_sents.shape
    H = prepped["w_hh_t"].shape[0]

    sorted_idx = jnp.argsort(-lengths)                            # descending (stable)
    ids_sorted = input_sents[sorted_idx].astype(jnp.int32)        # (B, T)
    lens_sorted = lengths[sorted_idx].astype(jnp.int32).reshape(B, 1)

    # Time-major (t*B + b) column of token ids so the kernel prologue can take
    # contiguous (B, 3H) row-slices per step.
    ids_col = ids_sorted.T.reshape(T * B, 1)

    # grid=(): single invocation, every operand placed whole in VMEM (~25 KiB
    # total — far under any VMEM limit on v5e/v6e/v7x); the time loop is
    # unrolled inside the kernel.
    return pl.pallas_call(
        gru_encode_kernel,
        out_shape=jax.ShapeDtypeStruct((B, H), jnp.float32),
    )(ids_col, lens_sorted, prepped["gates_table"],
      prepped["w_hh_t"], prepped["b_hh_n"])


def gru_encode_ref(x_tbe, lengths, w_ih, w_hh, b_ih, b_hh):
    """Pure-JAX reference (lax.scan) for correctness checking."""
    T, B, E = x_tbe.shape
    H = w_hh.shape[1]
    hp = jax.lax.Precision.HIGHEST

    def step(h, inp):
        x_t, t = inp
        gi = jnp.dot(x_t, w_ih.T, precision=hp) + b_ih
        gh = jnp.dot(h, w_hh.T, precision=hp) + b_hh
        i_r, i_z, i_n = jnp.split(gi, 3, axis=1)
        h_r, h_z, h_n = jnp.split(gh, 3, axis=1)
        r = jax.nn.sigmoid(i_r + h_r)
        z = jax.nn.sigmoid(i_z + h_z)
        n = jnp.tanh(i_n + r * h_n)
        h_new = (1.0 - z) * n + z * h
        mask = (t < lengths)[:, None].astype(h.dtype)
        return mask * h_new + (1.0 - mask) * h, None

    h0 = jnp.zeros((B, H), jnp.float32)
    h, _ = jax.lax.scan(step, h0, (x_tbe, jnp.arange(T)))
    return h


if __name__ == "__main__":
    VOCAB, EMBED, HIDDEN = 50, 32, 32
    B, T = 4, 8

    key = jax.random.PRNGKey(0)
    k_emb, k_wih, k_whh, k_bih, k_bhh, k_tok, k_len = jax.random.split(key, 7)

    # Deterministic parameter init (shapes follow nn.Embedding / nn.GRU).
    params = {
        "embedding": jax.random.normal(k_emb, (VOCAB, EMBED), jnp.float32) * 0.1,
        "w_ih": jax.random.normal(k_wih, (3 * HIDDEN, EMBED), jnp.float32) * 0.1,
        "w_hh": jax.random.normal(k_whh, (3 * HIDDEN, HIDDEN), jnp.float32) * 0.1,
        "b_ih": jax.random.normal(k_bih, (3 * HIDDEN,), jnp.float32) * 0.1,
        "b_hh": jax.random.normal(k_bhh, (3 * HIDDEN,), jnp.float32) * 0.1,
    }

    input_sents = jax.random.randint(k_tok, (B, T), 0, VOCAB, dtype=jnp.int32)
    lengths = jax.random.randint(k_len, (B,), 1, T + 1, dtype=jnp.int32)

    prepped = jax.tree_util.tree_map(jax.block_until_ready,
                                     prepare_params(params))    # one-time prep

    hidden = jax.block_until_ready(sentence_encode(input_sents, lengths, prepped))
    assert hidden.shape == (B, HIDDEN)

    # Cross-check against a pure-JAX reference on the same sorted inputs.
    sorted_idx = jnp.argsort(-lengths)
    emb_gathered = params["embedding"][input_sents[sorted_idx]]
    ref = gru_encode_ref(jnp.transpose(emb_gathered, (1, 0, 2)).astype(jnp.float32),
                         lengths[sorted_idx],
                         params["w_ih"], params["w_hh"],
                         params["b_ih"], params["b_hh"])
    assert jnp.allclose(hidden, ref, atol=1e-4, rtol=1e-4)

    print("KERNEL_OK")
</pallas_src>

<mosaic_0001>
module attributes {stable_mosaic.version = 11 : i64} {
  func.func @gru_encode_kernel(%arg0: memref<32x1xi32, #tpu.memory_space<vmem>>, %arg1: memref<4x1xi32, #tpu.memory_space<vmem>>, %arg2: memref<50x96xf32, #tpu.memory_space<vmem>>, %arg3: memref<32x96xf32, #tpu.memory_space<vmem>>, %arg4: memref<1x32xf32, #tpu.memory_space<vmem>>, %arg5: memref<4x32xf32, #tpu.memory_space<vmem>>) attributes {dimension_semantics = [], scalar_prefetch = 0 : i64, scratch_operands = 0 : i64, tpu.core_type = #tpu.core_type<tc>} {
    %c0 = arith.constant 0 : index
    %c0_0 = arith.constant 0 : index
    %0 = vector.load %arg0[%c0, %c0_0] : memref<32x1xi32, #tpu.memory_space<vmem>>, vector<32x1xi32>
    %1 = tpu.iota {dimensions = array<i32: 1>} : vector<32x50xi32>
    %2 = vector.broadcast %0 : vector<32x1xi32> to vector<32x50xi32>
    %3 = arith.cmpi eq, %2, %1 : vector<32x50xi32>
    %4 = arith.extui %3 : vector<32x50xi1> to vector<32x50xi32>
    %5 = arith.sitofp %4 : vector<32x50xi32> to vector<32x50xf32>
    %c0_1 = arith.constant 0 : index
    %c0_2 = arith.constant 0 : index
    %6 = vector.load %arg2[%c0_1, %c0_2] : memref<50x96xf32, #tpu.memory_space<vmem>>, vector<50x96xf32>
    %cst = arith.constant dense<0.000000e+00> : vector<32x96xf32>
    %7 = tpu.matmul %5, %6, %cst {dimension_numbers = #tpu.dot_dimension_numbers<[1], [0], [0], [1], [0, 0, 1, 1], [], []>} : vector<32x50xf32>, vector<50x96xf32>, vector<32x96xf32> -> vector<32x96xf32>
    %c0_3 = arith.constant 0 : index
    %c0_4 = arith.constant 0 : index
    %8 = vector.load %arg3[%c0_3, %c0_4] : memref<32x96xf32, #tpu.memory_space<vmem>>, vector<32x96xf32>
    %c0_5 = arith.constant 0 : index
    %c0_6 = arith.constant 0 : index
    %9 = vector.load %arg4[%c0_5, %c0_6] : memref<1x32xf32, #tpu.memory_space<vmem>>, vector<1x32xf32>
    %c0_7 = arith.constant 0 : index
    %c0_8 = arith.constant 0 : index
    %10 = vector.load %arg1[%c0_7, %c0_8] : memref<4x1xi32, #tpu.memory_space<vmem>>, vector<4x1xi32>
    %cst_9 = arith.constant 0.000000e+00 : f32
    %11 = vector.broadcast %cst_9 : f32 to vector<4x32xf32>
    %12 = vector.extract_strided_slice %7 {offsets = [0, 0], sizes = [4, 96], strides = [1, 1]} : vector<32x96xf32> to vector<4x96xf32>
    %cst_10 = arith.constant dense<0.000000e+00> : vector<4x96xf32>
    %13 = tpu.matmul %11, %8, %cst_10 {dimension_numbers = #tpu.dot_dimension_numbers<[1], [0], [0], [1], [0, 0, 1, 1], [], []>} : vector<4x32xf32>, vector<32x96xf32>, vector<4x96xf32> -> vector<4x96xf32>
    %14 = vector.extract_strided_slice %12 {offsets = [0, 0], sizes = [4, 32], strides = [1, 1]} : vector<4x96xf32> to vector<4x32xf32>
    %15 = vector.extract_strided_slice %13 {offsets = [0, 0], sizes = [4, 32], strides = [1, 1]} : vector<4x96xf32> to vector<4x32xf32>
    %16 = arith.addf %14, %15 : vector<4x32xf32>
    %17 = arith.negf %16 : vector<4x32xf32>
    %18 = math.exp %17 : vector<4x32xf32>
    %cst_11 = arith.constant 1.000000e+00 : f32
    %19 = vector.broadcast %cst_11 : f32 to vector<4x32xf32>
    %20 = arith.addf %19, %18 : vector<4x32xf32>
    %21 = arith.divf %19, %20 : vector<4x32xf32>
    %22 = vector.extract_strided_slice %12 {offsets = [0, 32], sizes = [4, 32], strides = [1, 1]} : vector<4x96xf32> to vector<4x32xf32>
    %23 = vector.extract_strided_slice %13 {offsets = [0, 32], sizes = [4, 32], strides = [1, 1]} : vector<4x96xf32> to vector<4x32xf32>
    %24 = arith.addf %22, %23 : vector<4x32xf32>
    %25 = arith.negf %24 : vector<4x32xf32>
    %26 = math.exp %25 : vector<4x32xf32>
    %cst_12 = arith.constant 1.000000e+00 : f32
    %27 = vector.broadcast %cst_12 : f32 to vector<4x32xf32>
    %28 = arith.addf %27, %26 : vector<4x32xf32>
    %29 = arith.divf %27, %28 : vector<4x32xf32>
    %30 = vector.extract_strided_slice %12 {offsets = [0, 64], sizes = [4, 32], strides = [1, 1]} : vector<4x96xf32> to vector<4x32xf32>
    %31 = vector.extract_strided_slice %13 {offsets = [0, 64], sizes = [4, 32], strides = [1, 1]} : vector<4x96xf32> to vector<4x32xf32>
    %32 = vector.broadcast %9 : vector<1x32xf32> to vector<4x32xf32>
    %33 = arith.addf %31, %32 : vector<4x32xf32>
    %34 = arith.mulf %21, %33 : vector<4x32xf32>
    %35 = arith.addf %30, %34 : vector<4x32xf32>
    %36 = math.tanh %35 : vector<4x32xf32>
    %37 = arith.subf %11, %36 : vector<4x32xf32>
    %38 = arith.mulf %29, %37 : vector<4x32xf32>
    %39 = arith.addf %36, %38 : vector<4x32xf32>
    %c0_i32 = arith.constant 0 : i32
    %40 = vector.broadcast %c0_i32 : i32 to vector<4x1xi32>
    %41 = arith.cmpi sgt, %10, %40 : vector<4x1xi32>
    %42 = vector.shape_cast %41 : vector<4x1xi1> to vector<4x1xi1>
    %43 = vector.broadcast %42 : vector<4x1xi1> to vector<4x32xi1>
    %44 = arith.select %43, %39, %11 : vector<4x32xi1>, vector<4x32xf32>
    %45 = vector.extract_strided_slice %7 {offsets = [4, 0], sizes = [4, 96], strides = [1, 1]} : vector<32x96xf32> to vector<4x96xf32>
    %cst_13 = arith.constant dense<0.000000e+00> : vector<4x96xf32>
    %46 = tpu.matmul %44, %8, %cst_13 {dimension_numbers = #tpu.dot_dimension_numbers<[1], [0], [0], [1], [0, 0, 1, 1], [], []>} : vector<4x32xf32>, vector<32x96xf32>, vector<4x96xf32> -> vector<4x96xf32>
    %47 = vector.extract_strided_slice %45 {offsets = [0, 0], sizes = [4, 32], strides = [1, 1]} : vector<4x96xf32> to vector<4x32xf32>
    %48 = vector.extract_strided_slice %46 {offsets = [0, 0], sizes = [4, 32], strides = [1, 1]} : vector<4x96xf32> to vector<4x32xf32>
    %49 = arith.addf %47, %48 : vector<4x32xf32>
    %50 = arith.negf %49 : vector<4x32xf32>
    %51 = math.exp %50 : vector<4x32xf32>
    %cst_14 = arith.constant 1.000000e+00 : f32
    %52 = vector.broadcast %cst_14 : f32 to vector<4x32xf32>
    %53 = arith.addf %52, %51 : vector<4x32xf32>
    %54 = arith.divf %52, %53 : vector<4x32xf32>
    %55 = vector.extract_strided_slice %45 {offsets = [0, 32], sizes = [4, 32], strides = [1, 1]} : vector<4x96xf32> to vector<4x32xf32>
    %56 = vector.extract_strided_slice %46 {offsets = [0, 32], sizes = [4, 32], strides = [1, 1]} : vector<4x96xf32> to vector<4x32xf32>
    %57 = arith.addf %55, %56 : vector<4x32xf32>
    %58 = arith.negf %57 : vector<4x32xf32>
    %59 = math.exp %58 : vector<4x32xf32>
    %cst_15 = arith.constant 1.000000e+00 : f32
    %60 = vector.broadcast %cst_15 : f32 to vector<4x32xf32>
    %61 = arith.addf %60, %59 : vector<4x32xf32>
    %62 = arith.divf %60, %61 : vector<4x32xf32>
    %63 = vector.extract_strided_slice %45 {offsets = [0, 64], sizes = [4, 32], strides = [1, 1]} : vector<4x96xf32> to vector<4x32xf32>
    %64 = vector.extract_strided_slice %46 {offsets = [0, 64], sizes = [4, 32], strides = [1, 1]} : vector<4x96xf32> to vector<4x32xf32>
    %65 = vector.broadcast %9 : vector<1x32xf32> to vector<4x32xf32>
    %66 = arith.addf %64, %65 : vector<4x32xf32>
    %67 = arith.mulf %54, %66 : vector<4x32xf32>
    %68 = arith.addf %63, %67 : vector<4x32xf32>
    %69 = math.tanh %68 : vector<4x32xf32>
    %70 = arith.subf %44, %69 : vector<4x32xf32>
    %71 = arith.mulf %62, %70 : vector<4x32xf32>
    %72 = arith.addf %69, %71 : vector<4x32xf32>
    %c1_i32 = arith.constant 1 : i32
    %73 = vector.broadcast %c1_i32 : i32 to vector<4x1xi32>
    %74 = arith.cmpi sgt, %10, %73 : vector<4x1xi32>
    %75 = vector.shape_cast %74 : vector<4x1xi1> to vector<4x1xi1>
    %76 = vector.broadcast %75 : vector<4x1xi1> to vector<4x32xi1>
    %77 = arith.select %76, %72, %44 : vector<4x32xi1>, vector<4x32xf32>
    %78 = vector.extract_strided_slice %7 {offsets = [8, 0], sizes = [4, 96], strides = [1, 1]} : vector<32x96xf32> to vector<4x96xf32>
    %cst_16 = arith.constant dense<0.000000e+00> : vector<4x96xf32>
    %79 = tpu.matmul %77, %8, %cst_16 {dimension_numbers = #tpu.dot_dimension_numbers<[1], [0], [0], [1], [0, 0, 1, 1], [], []>} : vector<4x32xf32>, vector<32x96xf32>, vector<4x96xf32> -> vector<4x96xf32>
    %80 = vector.extract_strided_slice %78 {offsets = [0, 0], sizes = [4, 32], strides = [1, 1]} : vector<4x96xf32> to vector<4x32xf32>
    %81 = vector.extract_strided_slice %79 {offsets = [0, 0], sizes = [4, 32], strides = [1, 1]} : vector<4x96xf32> to vector<4x32xf32>
    %82 = arith.addf %80, %81 : vector<4x32xf32>
    %83 = arith.negf %82 : vector<4x32xf32>
    %84 = math.exp %83 : vector<4x32xf32>
    %cst_17 = arith.constant 1.000000e+00 : f32
    %85 = vector.broadcast %cst_17 : f32 to vector<4x32xf32>
    %86 = arith.addf %85, %84 : vector<4x32xf32>
    %87 = arith.divf %85, %86 : vector<4x32xf32>
    %88 = vector.extract_strided_slice %78 {offsets = [0, 32], sizes = [4, 32], strides = [1, 1]} : vector<4x96xf32> to vector<4x32xf32>
    %89 = vector.extract_strided_slice %79 {offsets = [0, 32], sizes = [4, 32], strides = [1, 1]} : vector<4x96xf32> to vector<4x32xf32>
    %90 = arith.addf %88, %89 : vector<4x32xf32>
    %91 = arith.negf %90 : vector<4x32xf32>
    %92 = math.exp %91 : vector<4x32xf32>
    %cst_18 = arith.constant 1.000000e+00 : f32
    %93 = vector.broadcast %cst_18 : f32 to vector<4x32xf32>
    %94 = arith.addf %93, %92 : vector<4x32xf32>
    %95 = arith.divf %93, %94 : vector<4x32xf32>
    %96 = vector.extract_strided_slice %78 {offsets = [0, 64], sizes = [4, 32], strides = [1, 1]} : vector<4x96xf32> to vector<4x32xf32>
    %97 = vector.extract_strided_slice %79 {offsets = [0, 64], sizes = [4, 32], strides = [1, 1]} : vector<4x96xf32> to vector<4x32xf32>
    %98 = vector.broadcast %9 : vector<1x32xf32> to vector<4x32xf32>
    %99 = arith.addf %97, %98 : vector<4x32xf32>
    %100 = arith.mulf %87, %99 : vector<4x32xf32>
    %101 = arith.addf %96, %100 : vector<4x32xf32>
    %102 = math.tanh %101 : vector<4x32xf32>
    %103 = arith.subf %77, %102 : vector<4x32xf32>
    %104 = arith.mulf %95, %103 : vector<4x32xf32>
    %105 = arith.addf %102, %104 : vector<4x32xf32>
    %c2_i32 = arith.constant 2 : i32
    %106 = vector.broadcast %c2_i32 : i32 to vector<4x1xi32>
    %107 = arith.cmpi sgt, %10, %106 : vector<4x1xi32>
    %108 = vector.shape_cast %107 : vector<4x1xi1> to vector<4x1xi1>
    %109 = vector.broadcast %108 : vector<4x1xi1> to vector<4x32xi1>
    %110 = arith.select %109, %105, %77 : vector<4x32xi1>, vector<4x32xf32>
    %111 = vector.extract_strided_slice %7 {offsets = [12, 0], sizes = [4, 96], strides = [1, 1]} : vector<32x96xf32> to vector<4x96xf32>
    %cst_19 = arith.constant dense<0.000000e+00> : vector<4x96xf32>
    %112 = tpu.matmul %110, %8, %cst_19 {dimension_numbers = #tpu.dot_dimension_numbers<[1], [0], [0], [1], [0, 0, 1, 1], [], []>} : vector<4x32xf32>, vector<32x96xf32>, vector<4x96xf32> -> vector<4x96xf32>
    %113 = vector.extract_strided_slice %111 {offsets = [0, 0], sizes = [4, 32], strides = [1, 1]} : vector<4x96xf32> to vector<4x32xf32>
    %114 = vector.extract_strided_slice %112 {offsets = [0, 0], sizes = [4, 32], strides = [1, 1]} : vector<4x96xf32> to vector<4x32xf32>
    %115 = arith.addf %113, %114 : vector<4x32xf32>
    %116 = arith.negf %115 : vector<4x32xf32>
    %117 = math.exp %116 : vector<4x32xf32>
    %cst_20 = arith.constant 1.000000e+00 : f32
    %118 = vector.broadcast %cst_20 : f32 to vector<4x32xf32>
    %119 = arith.addf %118, %117 : vector<4x32xf32>
    %120 = arith.divf %118, %119 : vector<4x32xf32>
    %121 = vector.extract_strided_slice %111 {offsets = [0, 32], sizes = [4, 32], strides = [1, 1]} : vector<4x96xf32> to vector<4x32xf32>
    %122 = vector.extract_strided_slice %112 {offsets = [0, 32], sizes = [4, 32], strides = [1, 1]} : vector<4x96xf32> to vector<4x32xf32>
    %123 = arith.addf %121, %122 : vector<4x32xf32>
    %124 = arith.negf %123 : vector<4x32xf32>
    %125 = math.exp %124 : vector<4x32xf32>
    %cst_21 = arith.constant 1.000000e+00 : f32
    %126 = vector.broadcast %cst_21 : f32 to vector<4x32xf32>
    %127 = arith.addf %126, %125 : vector<4x32xf32>
    %128 = arith.divf %126, %127 : vector<4x32xf32>
    %129 = vector.extract_strided_slice %111 {offsets = [0, 64], sizes = [4, 32], strides = [1, 1]} : vector<4x96xf32> to vector<4x32xf32>
    %130 = vector.extract_strided_slice %112 {offsets = [0, 64], sizes = [4, 32], strides = [1, 1]} : vector<4x96xf32> to vector<4x32xf32>
    %131 = vector.broadcast %9 : vector<1x32xf32> to vector<4x32xf32>
    %132 = arith.addf %130, %131 : vector<4x32xf32>
    %133 = arith.mulf %120, %132 : vector<4x32xf32>
    %134 = arith.addf %129, %133 : vector<4x32xf32>
    %135 = math.tanh %134 : vector<4x32xf32>
    %136 = arith.subf %110, %135 : vector<4x32xf32>
    %137 = arith.mulf %128, %136 : vector<4x32xf32>
    %138 = arith.addf %135, %137 : vector<4x32xf32>
    %c3_i32 = arith.constant 3 : i32
    %139 = vector.broadcast %c3_i32 : i32 to vector<4x1xi32>
    %140 = arith.cmpi sgt, %10, %139 : vector<4x1xi32>
    %141 = vector.shape_cast %140 : vector<4x1xi1> to vector<4x1xi1>
    %142 = vector.broadcast %141 : vector<4x1xi1> to vector<4x32xi1>
    %143 = arith.select %142, %138, %110 : vector<4x32xi1>, vector<4x32xf32>
    %144 = vector.extract_strided_slice %7 {offsets = [16, 0], sizes = [4, 96], strides = [1, 1]} : vector<32x96xf32> to vector<4x96xf32>
    %cst_22 = arith.constant dense<0.000000e+00> : vector<4x96xf32>
    %145 = tpu.matmul %143, %8, %cst_22 {dimension_numbers = #tpu.dot_dimension_numbers<[1], [0], [0], [1], [0, 0, 1, 1], [], []>} : vector<4x32xf32>, vector<32x96xf32>, vector<4x96xf32> -> vector<4x96xf32>
    %146 = vector.extract_strided_slice %144 {offsets = [0, 0], sizes = [4, 32], strides = [1, 1]} : vector<4x96xf32> to vector<4x32xf32>
    %147 = vector.extract_strided_slice %145 {offsets = [0, 0], sizes = [4, 32], strides = [1, 1]} : vector<4x96xf32> to vector<4x32xf32>
    %148 = arith.addf %146, %147 : vector<4x32xf32>
    %149 = arith.negf %148 : vector<4x32xf32>
    %150 = math.exp %149 : vector<4x32xf32>
    %cst_23 = arith.constant 1.000000e+00 : f32
    %151 = vector.broadcast %cst_23 : f32 to vector<4x32xf32>
    %152 = arith.addf %151, %150 : vector<4x32xf32>
    %153 = arith.divf %151, %152 : vector<4x32xf32>
    %154 = vector.extract_strided_slice %144 {offsets = [0, 32], sizes = [4, 32], strides = [1, 1]} : vector<4x96xf32> to vector<4x32xf32>
    %155 = vector.extract_strided_slice %145 {offsets = [0, 32], sizes = [4, 32], strides = [1, 1]} : vector<4x96xf32> to vector<4x32xf32>
    %156 = arith.addf %154, %155 : vector<4x32xf32>
    %157 = arith.negf %156 : vector<4x32xf32>
    %158 = math.exp %157 : vector<4x32xf32>
    %cst_24 = arith.constant 1.000000e+00 : f32
    %159 = vector.broadcast %cst_24 : f32 to vector<4x32xf32>
    %160 = arith.addf %159, %158 : vector<4x32xf32>
    %161 = arith.divf %159, %160 : vector<4x32xf32>
    %162 = vector.extract_strided_slice %144 {offsets = [0, 64], sizes = [4, 32], strides = [1, 1]} : vector<4x96xf32> to vector<4x32xf32>
    %163 = vector.extract_strided_slice %145 {offsets = [0, 64], sizes = [4, 32], strides = [1, 1]} : vector<4x96xf32> to vector<4x32xf32>
    %164 = vector.broadcast %9 : vector<1x32xf32> to vector<4x32xf32>
    %165 = arith.addf %163, %164 : vector<4x32xf32>
    %166 = arith.mulf %153, %165 : vector<4x32xf32>
    %167 = arith.addf %162, %166 : vector<4x32xf32>
    %168 = math.tanh %167 : vector<4x32xf32>
    %169 = arith.subf %143, %168 : vector<4x32xf32>
    %170 = arith.mulf %161, %169 : vector<4x32xf32>
    %171 = arith.addf %168, %170 : vector<4x32xf32>
    %c4_i32 = arith.constant 4 : i32
    %172 = vector.broadcast %c4_i32 : i32 to vector<4x1xi32>
    %173 = arith.cmpi sgt, %10, %172 : vector<4x1xi32>
    %174 = vector.shape_cast %173 : vector<4x1xi1> to vector<4x1xi1>
    %175 = vector.broadcast %174 : vector<4x1xi1> to vector<4x32xi1>
    %176 = arith.select %175, %171, %143 : vector<4x32xi1>, vector<4x32xf32>
    %177 = vector.extract_strided_slice %7 {offsets = [20, 0], sizes = [4, 96], strides = [1, 1]} : vector<32x96xf32> to vector<4x96xf32>
    %cst_25 = arith.constant dense<0.000000e+00> : vector<4x96xf32>
    %178 = tpu.matmul %176, %8, %cst_25 {dimension_numbers = #tpu.dot_dimension_numbers<[1], [0], [0], [1], [0, 0, 1, 1], [], []>} : vector<4x32xf32>, vector<32x96xf32>, vector<4x96xf32> -> vector<4x96xf32>
    %179 = vector.extract_strided_slice %177 {offsets = [0, 0], sizes = [4, 32], strides = [1, 1]} : vector<4x96xf32> to vector<4x32xf32>
    %180 = vector.extract_strided_slice %178 {offsets = [0, 0], sizes = [4, 32], strides = [1, 1]} : vector<4x96xf32> to vector<4x32xf32>
    %181 = arith.addf %179, %180 : vector<4x32xf32>
    %182 = arith.negf %181 : vector<4x32xf32>
    %183 = math.exp %182 : vector<4x32xf32>
    %cst_26 = arith.constant 1.000000e+00 : f32
    %184 = vector.broadcast %cst_26 : f32 to vector<4x32xf32>
    %185 = arith.addf %184, %183 : vector<4x32xf32>
    %186 = arith.divf %184, %185 : vector<4x32xf32>
    %187 = vector.extract_strided_slice %177 {offsets = [0, 32], sizes = [4, 32], strides = [1, 1]} : vector<4x96xf32> to vector<4x32xf32>
    %188 = vector.extract_strided_slice %178 {offsets = [0, 32], sizes = [4, 32], strides = [1, 1]} : vector<4x96xf32> to vector<4x32xf32>
    %189 = arith.addf %187, %188 : vector<4x32xf32>
    %190 = arith.negf %189 : vector<4x32xf32>
    %191 = math.exp %190 : vector<4x32xf32>
    %cst_27 = arith.constant 1.000000e+00 : f32
    %192 = vector.broadcast %cst_27 : f32 to vector<4x32xf32>
    %193 = arith.addf %192, %191 : vector<4x32xf32>
    %194 = arith.divf %192, %193 : vector<4x32xf32>
    %195 = vector.extract_strided_slice %177 {offsets = [0, 64], sizes = [4, 32], strides = [1, 1]} : vector<4x96xf32> to vector<4x32xf32>
    %196 = vector.extract_strided_slice %178 {offsets = [0, 64], sizes = [4, 32], strides = [1, 1]} : vector<4x96xf32> to vector<4x32xf32>
    %197 = vector.broadcast %9 : vector<1x32xf32> to vector<4x32xf32>
    %198 = arith.addf %196, %197 : vector<4x32xf32>
    %199 = arith.mulf %186, %198 : vector<4x32xf32>
    %200 = arith.addf %195, %199 : vector<4x32xf32>
    %201 = math.tanh %200 : vector<4x32xf32>
    %202 = arith.subf %176, %201 : vector<4x32xf32>
    %203 = arith.mulf %194, %202 : vector<4x32xf32>
    %204 = arith.addf %201, %203 : vector<4x32xf32>
    %c5_i32 = arith.constant 5 : i32
    %205 = vector.broadcast %c5_i32 : i32 to vector<4x1xi32>
    %206 = arith.cmpi sgt, %10, %205 : vector<4x1xi32>
    %207 = vector.shape_cast %206 : vector<4x1xi1> to vector<4x1xi1>
    %208 = vector.broadcast %207 : vector<4x1xi1> to vector<4x32xi1>
    %209 = arith.select %208, %204, %176 : vector<4x32xi1>, vector<4x32xf32>
    %210 = vector.extract_strided_slice %7 {offsets = [24, 0], sizes = [4, 96], strides = [1, 1]} : vector<32x96xf32> to vector<4x96xf32>
    %cst_28 = arith.constant dense<0.000000e+00> : vector<4x96xf32>
    %211 = tpu.matmul %209, %8, %cst_28 {dimension_numbers = #tpu.dot_dimension_numbers<[1], [0], [0], [1], [0, 0, 1, 1], [], []>} : vector<4x32xf32>, vector<32x96xf32>, vector<4x96xf32> -> vector<4x96xf32>
    %212 = vector.extract_strided_slice %210 {offsets = [0, 0], sizes = [4, 32], strides = [1, 1]} : vector<4x96xf32> to vector<4x32xf32>
    %213 = vector.extract_strided_slice %211 {offsets = [0, 0], sizes = [4, 32], strides = [1, 1]} : vector<4x96xf32> to vector<4x32xf32>
    %214 = arith.addf %212, %213 : vector<4x32xf32>
    %215 = arith.negf %214 : vector<4x32xf32>
    %216 = math.exp %215 : vector<4x32xf32>
    %cst_29 = arith.constant 1.000000e+00 : f32
    %217 = vector.broadcast %cst_29 : f32 to vector<4x32xf32>
    %218 = arith.addf %217, %216 : vector<4x32xf32>
    %219 = arith.divf %217, %218 : vector<4x32xf32>
    %220 = vector.extract_strided_slice %210 {offsets = [0, 32], sizes = [4, 32], strides = [1, 1]} : vector<4x96xf32> to vector<4x32xf32>
    %221 = vector.extract_strided_slice %211 {offsets = [0, 32], sizes = [4, 32], strides = [1, 1]} : vector<4x96xf32> to vector<4x32xf32>
    %222 = arith.addf %220, %221 : vector<4x32xf32>
    %223 = arith.negf %222 : vector<4x32xf32>
    %224 = math.exp %223 : vector<4x32xf32>
    %cst_30 = arith.constant 1.000000e+00 : f32
    %225 = vector.broadcast %cst_30 : f32 to vector<4x32xf32>
    %226 = arith.addf %225, %224 : vector<4x32xf32>
    %227 = arith.divf %225, %226 : vector<4x32xf32>
    %228 = vector.extract_strided_slice %210 {offsets = [0, 64], sizes = [4, 32], strides = [1, 1]} : vector<4x96xf32> to vector<4x32xf32>
    %229 = vector.extract_strided_slice %211 {offsets = [0, 64], sizes = [4, 32], strides = [1, 1]} : vector<4x96xf32> to vector<4x32xf32>
    %230 = vector.broadcast %9 : vector<1x32xf32> to vector<4x32xf32>
    %231 = arith.addf %229, %230 : vector<4x32xf32>
    %232 = arith.mulf %219, %231 : vector<4x32xf32>
    %233 = arith.addf %228, %232 : vector<4x32xf32>
    %234 = math.tanh %233 : vector<4x32xf32>
    %235 = arith.subf %209, %234 : vector<4x32xf32>
    %236 = arith.mulf %227, %235 : vector<4x32xf32>
    %237 = arith.addf %234, %236 : vector<4x32xf32>
    %c6_i32 = arith.constant 6 : i32
    %238 = vector.broadcast %c6_i32 : i32 to vector<4x1xi32>
    %239 = arith.cmpi sgt, %10, %238 : vector<4x1xi32>
    %240 = vector.shape_cast %239 : vector<4x1xi1> to vector<4x1xi1>
    %241 = vector.broadcast %240 : vector<4x1xi1> to vector<4x32xi1>
    %242 = arith.select %241, %237, %209 : vector<4x32xi1>, vector<4x32xf32>
    %243 = vector.extract_strided_slice %7 {offsets = [28, 0], sizes = [4, 96], strides = [1, 1]} : vector<32x96xf32> to vector<4x96xf32>
    %cst_31 = arith.constant dense<0.000000e+00> : vector<4x96xf32>
    %244 = tpu.matmul %242, %8, %cst_31 {dimension_numbers = #tpu.dot_dimension_numbers<[1], [0], [0], [1], [0, 0, 1, 1], [], []>} : vector<4x32xf32>, vector<32x96xf32>, vector<4x96xf32> -> vector<4x96xf32>
    %245 = vector.extract_strided_slice %243 {offsets = [0, 0], sizes = [4, 32], strides = [1, 1]} : vector<4x96xf32> to vector<4x32xf32>
    %246 = vector.extract_strided_slice %244 {offsets = [0, 0], sizes = [4, 32], strides = [1, 1]} : vector<4x96xf32> to vector<4x32xf32>
    %247 = arith.addf %245, %246 : vector<4x32xf32>
    %248 = arith.negf %247 : vector<4x32xf32>
    %249 = math.exp %248 : vector<4x32xf32>
    %cst_32 = arith.constant 1.000000e+00 : f32
    %250 = vector.broadcast %cst_32 : f32 to vector<4x32xf32>
    %251 = arith.addf %250, %249 : vector<4x32xf32>
    %252 = arith.divf %250, %251 : vector<4x32xf32>
    %253 = vector.extract_strided_slice %243 {offsets = [0, 32], sizes = [4, 32], strides = [1, 1]} : vector<4x96xf32> to vector<4x32xf32>
    %254 = vector.extract_strided_slice %244 {offsets = [0, 32], sizes = [4, 32], strides = [1, 1]} : vector<4x96xf32> to vector<4x32xf32>
    %255 = arith.addf %253, %254 : vector<4x32xf32>
    %256 = arith.negf %255 : vector<4x32xf32>
    %257 = math.exp %256 : vector<4x32xf32>
    %cst_33 = arith.constant 1.000000e+00 : f32
    %258 = vector.broadcast %cst_33 : f32 to vector<4x32xf32>
    %259 = arith.addf %258, %257 : vector<4x32xf32>
    %260 = arith.divf %258, %259 : vector<4x32xf32>
    %261 = vector.extract_strided_slice %243 {offsets = [0, 64], sizes = [4, 32], strides = [1, 1]} : vector<4x96xf32> to vector<4x32xf32>
    %262 = vector.extract_strided_slice %244 {offsets = [0, 64], sizes = [4, 32], strides = [1, 1]} : vector<4x96xf32> to vector<4x32xf32>
    %263 = vector.broadcast %9 : vector<1x32xf32> to vector<4x32xf32>
    %264 = arith.addf %262, %263 : vector<4x32xf32>
    %265 = arith.mulf %252, %264 : vector<4x32xf32>
    %266 = arith.addf %261, %265 : vector<4x32xf32>
    %267 = math.tanh %266 : vector<4x32xf32>
    %268 = arith.subf %242, %267 : vector<4x32xf32>
    %269 = arith.mulf %260, %268 : vector<4x32xf32>
    %270 = arith.addf %267, %269 : vector<4x32xf32>
    %c7_i32 = arith.constant 7 : i32
    %271 = vector.broadcast %c7_i32 : i32 to vector<4x1xi32>
    %272 = arith.cmpi sgt, %10, %271 : vector<4x1xi32>
    %273 = vector.shape_cast %272 : vector<4x1xi1> to vector<4x1xi1>
    %274 = vector.broadcast %273 : vector<4x1xi1> to vector<4x32xi1>
    %275 = arith.select %274, %270, %242 : vector<4x32xi1>, vector<4x32xf32>
    %c0_34 = arith.constant 0 : index
    %c0_35 = arith.constant 0 : index
    %276 = vector.load %arg5[%c0_34, %c0_35] : memref<4x32xf32, #tpu.memory_space<vmem>>, vector<4x32xf32>
    tpu.vector_store %arg5[%c0_34, %c0_35], %275 {strides = array<i32>} : memref<4x32xf32, #tpu.memory_space<vmem>>, vector<4x32xf32>,
    return
  }
}

</mosaic_0001>

<llo_original>
// kernel: neg.1
$region0: #{neg.1}
  #allocation0 [shape = 's32[1]{0}', space=sflag, size = 0x4, scoped, tag = 'scoped memory for neg.1']
  %s0 = inlined_call_operand.vmem [shape: s32[4], index: 0, kind: input, shape index: {}]
  %s1 = inlined_call_operand.vmem [shape: s32[4], index: 1, kind: output, shape index: {}]
  %v2 = vld [vmem:[%s0] sm:$0x1]
  %3 = xla_tuple %v2
  %4 = xla_tuple %3
  %v5 = vsub.s32 0, %v2
  %6 = xla_tuple %v5
  %7 = vst [vmem:[%s1] sm:$0x1] %v5

// kernel: sentence_encode.1
$region0: #{sentence_encode.1}
  #allocation0 [shape = 'u32[]', space=smem, size = 0x4, offset = 0x4, fixed_abs, tag = 'smem constant byte address 0x4 - core index']
  #allocation1 [shape = 'u32[144,128]{1,0:T(1,128)}', space=vmem, size = 0x12000, scoped, tag = 'internal scratch']
  %s0 = inlined_call_operand.vmem [shape: s32[32,1], index: 0, kind: input, shape index: {}]
  %s1 = inlined_call_operand.vmem [shape: s32[4,1], index: 1, kind: input, shape index: {}]
  %s2 = inlined_call_operand.vmem [shape: f32[50,96], index: 2, kind: input, shape index: {}]
  %s3 = inlined_call_operand.vmem [shape: f32[32,96], index: 3, kind: input, shape index: {}]
  %s4 = inlined_call_operand.vmem [shape: f32[1,32], index: 4, kind: input, shape index: {}]
  %s5 = inlined_call_operand.hbm [shape: f32[4,32], index: 5, kind: output, shape index: {}]
  %s6 = sld [smem:[#allocation0]]
  $region30: #{sentence_encode.1} parent=0
    _
  %s8 = ssub.s32 1, %s6
  %s9 = scalar_select 0, %s8, %s6
  $region1: #{sentence_encode.1} parent=0
    #allocation2 [shape = 'u8[2048]{0}', space=vmem, size = 0x800, scoped, tag = 'output window, operand 0, single buffered']
    #allocation3 [shape = 's32[1]{0}', space=sflag, size = 0x4, scoped, tag = 'scoped memory for sentence_encode.1']
    %10 = vsyncpa [#allocation3], 0
    // Predicated region
    $region2: #{sentence_encode.1} parent=1 // pred_check
      _
    $region3: #{sentence_encode.1} parent=1 // pred_check_branch
      %12 = sbr.rel (0) target = $region5
    $region4: #{sentence_encode.1} parent=1 // pred_region
      _
    $region5: #{sentence_encode.1} parent=1 // pred_fallthru
      _
    // Predicated region
    $region6: #{sentence_encode.1} parent=1 // pred_check
      _
    $region7: #{sentence_encode.1} parent=1 // pred_check_branch
      %14 = sbr.rel (0) target = $region9
    $region8: #{sentence_encode.1} parent=1 // pred_region
      _
    $region9: #{sentence_encode.1} parent=1 // pred_fallthru
      _
    // Predicated region
    $region10: #{sentence_encode.1} parent=1 // pred_check
      _
    $region11: #{sentence_encode.1} parent=1 // pred_check_branch
      %16 = sbr.rel (0) target = $region13
    $region12: #{sentence_encode.1} parent=1 // pred_region
      _
    $region13: #{sentence_encode.1} parent=1 // pred_fallthru
      _
    // Predicated region
    $region14: #{sentence_encode.1} parent=1 // pred_check
      _
    $region15: #{sentence_encode.1} parent=1 // pred_check_branch
      %18 = sbr.rel (0) target = $region17
    $region16: #{sentence_encode.1} parent=1 // pred_region
      _
    $region17: #{sentence_encode.1} parent=1 // pred_fallthru
      _
    // Predicated region
    $region18: #{sentence_encode.1} parent=1 // pred_check
      _
    $region19: #{sentence_encode.1} parent=1 // pred_check_branch
      %20 = sbr.rel (0) target = $region21
    $region20: #{sentence_encode.1} parent=1 // pred_region
      _
    $region21: #{sentence_encode.1} parent=1 // pred_fallthru
      _
    %v21 = vld [vmem:[%s0] sm:$0xff]
    %v22 = vld [vmem:[%s0 + $0x8] sm:$0xff]
    %v23 = vld [vmem:[%s0 + $0x10] sm:$0xff]
    %v24 = vld [vmem:[%s0 + $0x18] sm:$0xff]
    %v25 = vlaneseq
    %v26 = vand.u32 %v25, 127
    %27 = vset.pattern.permute.xlu0 0
    %28 = vperm.xlu0 %27, %v21
    %v29 = vpop.permute.xlu0 %28
    %30 = vset.pattern.permute.xlu0 0
    %31 = vperm.xlu0 %30, %v22
    %v32 = vpop.permute.xlu0 %31
    %33 = vset.pattern.permute.xlu0 0
    %34 = vperm.xlu0 %33, %v23
    %v35 = vpop.permute.xlu0 %34
    %36 = vset.pattern.permute.xlu0 0
    %37 = vperm.xlu0 %36, %v24
    %v38 = vpop.permute.xlu0 %37
    %vm39 = vcmp.eq.s32.totalorder %v29, %v26
    %vm40 = vcmp.eq.s32.totalorder %v32, %v26
    %vm41 = vcmp.eq.s32.totalorder %v35, %v26
    %vm42 = vcmp.eq.s32.totalorder %v38, %v26
    %v43 = vsel %vm39, 1, 0
    %v44 = vsel %vm40, 1, 0
    %v45 = vsel %vm41, 1, 0
    %v46 = vsel %vm42, 1, 0
    %v47 = vcvt.s32.f32 %v43
    %v48 = vcvt.s32.f32 %v44
    %v49 = vcvt.s32.f32 %v45
    %v50 = vcvt.s32.f32 %v46
    %v51 = vld [vmem:[%s2] sm:$0xff]
    %v52 = vld [vmem:[%s2 + $0x8] sm:$0xff]
    %v53 = vld [vmem:[%s2 + $0x10] sm:$0xff]
    %v54 = vld [vmem:[%s2 + $0x18] sm:$0xff]
    %v55 = vld [vmem:[%s2 + $0x20] sm:$0xff]
    %v56 = vld [vmem:[%s2 + $0x28] sm:$0xff]
    %v57 = vld [vmem:[%s2 + $0x30] sm:$0x3]
    %vm58 = vcmask 408576
    %v60 = vsel %vm58, %v47, 0
    %v63 = vsel %vm58, %v48, 0
    %v66 = vsel %vm58, %v49, 0
    %v69 = vsel %vm58, %v50, 0
    %vm71 = vcmask 1041408
    %v73 = vsel %vm71, %v57, 0
    %75 = vmatprep.subr.mxu0 0.0
    %76 = vmatpush1.msra.mxu0 %v51
    %77 = vmatprep.subr.mxu0 0.0
    %78 = vmatpush1.msra.mxu0 %v52
    %79 = vmatprep.subr.mxu0 0.0
    %80 = vmatpush1.msra.mxu0 %v53
    %81 = vmatprep.subr.mxu0 0.0
    %82 = vmatpush1.msra.mxu0 %v54
    %83 = vmatprep.subr.mxu0 0.0
    %84 = vmatpush1.msra.mxu0 %v55
    %85 = vmatprep.subr.mxu0 0.0
    %86 = vmatpush1.msra.mxu0 %v56
    %87 = vmatprep.subr.mxu0 0.0
    %88 = vmatpush1.msra.mxu0 %v73
    %89 = vmatprep.subr.mxu0 0.0
    %90 = vmatpush1.msra.mxu0 0.0
    %91 = vmatprep.subr.mxu0 0.0
    %92 = vmatpush1.msra.mxu0 0.0
    %93 = vmatprep.subr.mxu0 0.0
    %94 = vmatpush1.msra.mxu0 0.0
    %95 = vmatprep.subr.mxu0 0.0
    %96 = vmatpush1.msra.mxu0 0.0
    %97 = vmatprep.subr.mxu0 0.0
    %98 = vmatpush1.msra.mxu0 0.0
    %99 = vmatprep.subr.mxu0 0.0
    %100 = vmatpush1.msra.mxu0 0.0
    %101 = vmatprep.subr.mxu0 0.0
    %102 = vmatpush1.msra.mxu0 0.0
    %103 = vmatprep.subr.mxu0 0.0
    %104 = vmatpush1.msra.mxu0 0.0
    %105 = vmatprep.subr.mxu0 0.0
    %106 = vmatpush1.msra.mxu0 0.0
    %107 = vmatprep.subr.mxu0 0.0
    %108 = vmatpush1.msra.mxu0 0.0
    %109 = vmatprep.subr.mxu0 0.0
    %110 = vmatpush1.msra.mxu0 0.0
    %111 = vmatprep.subr.mxu0 0.0
    %112 = vmatpush1.msra.mxu0 0.0
    %113 = vmatprep.subr.mxu0 0.0
    %114 = vmatpush1.msra.mxu0 0.0
    %115 = vmatprep.subr.mxu0 0.0
    %116 = vmatpush1.msra.mxu0 0.0
    %117 = vmatprep.subr.mxu0 0.0
    %118 = vmatpush1.msra.mxu0 0.0
    %119 = vmatprep.subr.mxu0 0.0
    %120 = vmatpush1.msra.mxu0 0.0
    %121 = vmatprep.subr.mxu0 0.0
    %122 = vmatpush1.msra.mxu0 0.0
    %123 = vmatprep.subr.mxu0 0.0
    %124 = vmatpush1.msra.mxu0 0.0
    %125 = vmatprep.subr.mxu0 0.0
    %126 = vmatpush1.msra.mxu0 0.0
    %127 = vmatprep.subr.mxu0 0.0
    %128 = vmatpush1.msra.mxu0 0.0
    %129 = vmatprep.subr.mxu0 0.0
    %130 = vmatpush1.msra.mxu0 0.0
    %131 = vmatprep.subr.mxu0 0.0
    %132 = vmatpush1.msra.mxu0 0.0
    %133 = vmatprep.subr.mxu0 0.0
    %134 = vmatpush1.msra.mxu0 0.0
    %135 = vmatprep.subr.mxu0 0.0
    %136 = vmatpush1.msra.mxu0 0.0
    %137 = vmatprep.subr.mxu0 0.0
    %138 = vmatpush1.msra.mxu0 0.0
    %139 = vmatprep.mubr.f32.mxu0 0.0
    %140 = vmatmul.mubr.f32.gmra.mrb[0].mxu0 %v60
    %v141 = vpop.f32.mrb[0].mxu0
    %v142 = vadd.f32 0.0, %v141
    %v143 = vpop.f32.mrb[0].mxu0
    %144 = vmatprep.mubr.f32.mxu0 0.0
    %145 = vmatmul.mubr.f32.gmra.mrb[0].mxu0 %v63
    %v146 = vpop.f32.mrb[0].mxu0
    %v147 = vadd.f32 0.0, %v146
    %v148 = vpop.f32.mrb[0].mxu0
    %149 = vmatprep.mubr.f32.mxu0 0.0
    %150 = vmatmul.mubr.f32.gmra.mrb[0].mxu0 %v66
    %v151 = vpop.f32.mrb[0].mxu0
    %v152 = vadd.f32 0.0, %v151
    %v153 = vpop.f32.mrb[0].mxu0
    %154 = vmatprep.mubr.f32.mxu0 0.0
    %155 = vmatmul.mubr.f32.gmra.mrb[0].mxu0 %v69
    %v156 = vpop.f32.mrb[0].mxu0
    %v157 = vadd.f32 0.0, %v156
    %v158 = vpop.f32.mrb[0].mxu0
    %159 = vdwg.mxu0
    %v160 = vld [vmem:[%s3] sm:$0xff]
    %v161 = vld [vmem:[%s3 + $0x8] sm:$0xff]
    %v162 = vld [vmem:[%s3 + $0x10] sm:$0xff]
    %v163 = vld [vmem:[%s3 + $0x18] sm:$0xff]
    %v164 = vld [vmem:[%s4] sm:$0x1]
    %v165 = vld [vmem:[%s1] sm:$0xf]
    %vm166 = vcmask 261120
    %v168 = vsel %vm166, 0.0, 0
    %170 = vmatprep.subr.mxu0 0.0
    %171 = vmatpush1.msra.mxu0 %v160
    %172 = vmatprep.subr.mxu0 0.0
    %173 = vmatpush1.msra.mxu0 %v161
    %174 = vmatprep.subr.mxu0 0.0
    %175 = vmatpush1.msra.mxu0 %v162
    %176 = vmatprep.subr.mxu0 0.0
    %177 = vmatpush1.msra.mxu0 %v163
    %178 = vmatprep.subr.mxu0 0.0
    %179 = vmatpush1.msra.mxu0 0.0
    %180 = vmatprep.subr.mxu0 0.0
    %181 = vmatpush1.msra.mxu0 0.0
    %182 = vmatprep.subr.mxu0 0.0
    %183 = vmatpush1.msra.mxu0 0.0
    %184 = vmatprep.subr.mxu0 0.0
    %185 = vmatpush1.msra.mxu0 0.0
    %186 = vmatprep.subr.mxu0 0.0
    %187 = vmatpush1.msra.mxu0 0.0
    %188 = vmatprep.subr.mxu0 0.0
    %189 = vmatpush1.msra.mxu0 0.0
    %190 = vmatprep.subr.mxu0 0.0
    %191 = vmatpush1.msra.mxu0 0.0
    %192 = vmatprep.subr.mxu0 0.0
    %193 = vmatpush1.msra.mxu0 0.0
    %194 = vmatprep.subr.mxu0 0.0
    %195 = vmatpush1.msra.mxu0 0.0
    %196 = vmatprep.subr.mxu0 0.0
    %197 = vmatpush1.msra.mxu0 0.0
    %198 = vmatprep.subr.mxu0 0.0
    %199 = vmatpush1.msra.mxu0 0.0
    %200 = vmatprep.subr.mxu0 0.0
    %201 = vmatpush1.msra.mxu0 0.0
    %202 = vmatprep.subr.mxu0 0.0
    %203 = vmatpush1.msra.mxu0 0.0
    %204 = vmatprep.subr.mxu0 0.0
    %205 = vmatpush1.msra.mxu0 0.0
    %206 = vmatprep.subr.mxu0 0.0
    %207 = vmatpush1.msra.mxu0 0.0
    %208 = vmatprep.subr.mxu0 0.0
    %209 = vmatpush1.msra.mxu0 0.0
    %210 = vmatprep.subr.mxu0 0.0
    %211 = vmatpush1.msra.mxu0 0.0
    %212 = vmatprep.subr.mxu0 0.0
    %213 = vmatpush1.msra.mxu0 0.0
    %214 = vmatprep.subr.mxu0 0.0
    %215 = vmatpush1.msra.mxu0 0.0
    %216 = vmatprep.subr.mxu0 0.0
    %217 = vmatpush1.msra.mxu0 0.0
    %218 = vmatprep.subr.mxu0 0.0
    %219 = vmatpush1.msra.mxu0 0.0
    %220 = vmatprep.subr.mxu0 0.0
    %221 = vmatpush1.msra.mxu0 0.0
    %222 = vmatprep.subr.mxu0 0.0
    %223 = vmatpush1.msra.mxu0 0.0
    %224 = vmatprep.subr.mxu0 0.0
    %225 = vmatpush1.msra.mxu0 0.0
    %226 = vmatprep.subr.mxu0 0.0
    %227 = vmatpush1.msra.mxu0 0.0
    %228 = vmatprep.subr.mxu0 0.0
    %229 = vmatpush1.msra.mxu0 0.0
    %230 = vmatprep.subr.mxu0 0.0
    %231 = vmatpush1.msra.mxu0 0.0
    %232 = vmatprep.subr.mxu0 0.0
    %233 = vmatpush1.msra.mxu0 0.0
    %234 = vmatprep.mubr.f32.mxu0 0.0
    %235 = vmatmul.mubr.f32.gmra.mrb[0].mxu0 %v168
    %v236 = vpop.f32.mrb[0].mxu0
    %v237 = vadd.f32 0.0, %v236
    %v238 = vpop.f32.mrb[0].mxu0
    %239 = vdwg.mxu0
    %v240 = vadd.f32 %v142, %v237
    %v241 = vxor.u32 %v240, 2147483648
    %v242 = vmul.f32 %v241, 1.442695
    %v243 = vpow.pop %v242
    %v244 = vadd.f32 %v243, 1.0
    %v245 = vrcp.pop %v244
    %v246 = vmul.f32 1.0, %v245
    %v248 = vlaneseq
    %v249 = vshrl.u32 %v248, 7
    %v250 = vsub.s32 0, %v249
    %v251 = vrot.slane %v164, %v250
    %252 = vrot.lane.b32.xlu0 %v251, 64
    %v253 = vpop.permute.xlu0 %252
    %v255 = vadd.f32 %v237, %v253
    %257 = vrot.lane.b32.xlu0 %v255, 64
    %v258 = vpop.permute.xlu0 %257
    %v260 = vmul.f32 %v246, %v258
    %262 = vrot.lane.b32.xlu0 %v260, 64
    %v263 = vpop.permute.xlu0 %262
    %v265 = vadd.f32 %v142, %v263
    %v266 = vtanh.pop %v265
    %v267 = vsub.f32 0.0, %v266
    %269 = vrot.lane.b32.xlu0 %v267, 96
    %v270 = vpop.permute.xlu0 %269
    %v272 = vmul.f32 %v246, %v270
    %274 = vrot.lane.b32.xlu0 %v272, 32
    %v275 = vpop.permute.xlu0 %274
    %v277 = vadd.f32 %v266, %v275
    %vm278 = vcmp.gt.s32.totalorder %v165, 0
    %v279 = vsel %vm278, 1, 0
    %280 = vset.pattern.permute.xlu0 0
    %281 = vperm.xlu0 %280, %v279
    %v282 = vpop.permute.xlu0 %281
    %vm283 = vcmp.eq.s32.totalorder %v282, 1
    %v284 = vsel %vm283, %v277, 0.0
    %286 = vrot.lane.b32.xlu0 %v284, 64
    %v287 = vpop.permute.xlu0 %286
    %v288 = vsel %vm166, %v287, 0
    %290 = vmatprep.subr.mxu0 0.0
    %291 = vmatpush1.msra.mxu0 %v160
    %292 = vmatprep.subr.mxu0 0.0
    %293 = vmatpush1.msra.mxu0 %v161
    %294 = vmatprep.subr.mxu0 0.0
    %295 = vmatpush1.msra.mxu0 %v162
    %296 = vmatprep.subr.mxu0 0.0
    %297 = vmatpush1.msra.mxu0 %v163
    %298 = vmatprep.subr.mxu0 0.0
    %299 = vmatpush1.msra.mxu0 0.0
    %300 = vmatprep.subr.mxu0 0.0
    %301 = vmatpush1.msra.mxu0 0.0
    %302 = vmatprep.subr.mxu0 0.0
    %303 = vmatpush1.msra.mxu0 0.0
    %304 = vmatprep.subr.mxu0 0.0
    %305 = vmatpush1.msra.mxu0 0.0
    %306 = vmatprep.subr.mxu0 0.0
    %307 = vmatpush1.msra.mxu0 0.0
    %308 = vmatprep.subr.mxu0 0.0
    %309 = vmatpush1.msra.mxu0 0.0
    %310 = vmatprep.subr.mxu0 0.0
    %311 = vmatpush1.msra.mxu0 0.0
    %312 = vmatprep.subr.mxu0 0.0
    %313 = vmatpush1.msra.mxu0 0.0
    %314 = vmatprep.subr.mxu0 0.0
    %315 = vmatpush1.msra.mxu0 0.0
    %316 = vmatprep.subr.mxu0 0.0
    %317 = vmatpush1.msra.mxu0 0.0
    %318 = vmatprep.subr.mxu0 0.0
    %319 = vmatpush1.msra.mxu0 0.0
    %320 = vmatprep.subr.mxu0 0.0
    %321 = vmatpush1.msra.mxu0 0.0
    %322 = vmatprep.subr.mxu0 0.0
    %323 = vmatpush1.msra.mxu0 0.0
    %324 = vmatprep.subr.mxu0 0.0
    %325 = vmatpush1.msra.mxu0 0.0
    %326 = vmatprep.subr.mxu0 0.0
    %327 = vmatpush1.msra.mxu0 0.0
    %328 = vmatprep.subr.mxu0 0.0
    %329 = vmatpush1.msra.mxu0 0.0
    %330 = vmatprep.subr.mxu0 0.0
    %331 = vmatpush1.msra.mxu0 0.0
    %332 = vmatprep.subr.mxu0 0.0
    %333 = vmatpush1.msra.mxu0 0.0
    %334 = vmatprep.subr.mxu0 0.0
    %335 = vmatpush1.msra.mxu0 0.0
    %336 = vmatprep.subr.mxu0 0.0
    %337 = vmatpush1.msra.mxu0 0.0
    %338 = vmatprep.subr.mxu0 0.0
    %339 = vmatpush1.msra.mxu0 0.0
    %340 = vmatprep.subr.mxu0 0.0
    %341 = vmatpush1.msra.mxu0 0.0
    %342 = vmatprep.subr.mxu0 0.0
    %343 = vmatpush1.msra.mxu0 0.0
    %344 = vmatprep.subr.mxu0 0.0
    %345 = vmatpush1.msra.mxu0 0.0
    %346 = vmatprep.subr.mxu0 0.0
    %347 = vmatpush1.msra.mxu0 0.0
    %348 = vmatprep.subr.mxu0 0.0
    %349 = vmatpush1.msra.mxu0 0.0
    %350 = vmatprep.subr.mxu0 0.0
    %351 = vmatpush1.msra.mxu0 0.0
    %352 = vmatprep.subr.mxu0 0.0
    %353 = vmatpush1.msra.mxu0 0.0
    %354 = vmatprep.mubr.f32.mxu0 0.0
    %355 = vmatmul.mubr.f32.gmra.mrb[0].mxu0 %v288
    %v356 = vpop.f32.mrb[0].mxu0
    %v357 = vadd.f32 0.0, %v356
    %v358 = vpop.f32.mrb[0].mxu0
    %359 = vdwg.mxu0
    %v361 = vrot.slane %v357, 4
    %v363 = vadd.f32 %v142, %v361
    %v364 = vxor.u32 %v363, 2147483648
    %v365 = vmul.f32 %v364, 1.442695
    %v366 = vpow.pop %v365
    %v367 = vadd.f32 %v366, 1.0
    %v368 = vrcp.pop %v367
    %v369 = vmul.f32 1.0, %v368
    %v370 = vadd.f32 %v357, %v253
    %v372 = vrot.slane %v370, 4
    %373 = vrot.lane.b32.xlu0 %v372, 64
    %v374 = vpop.permute.xlu0 %373
    %v376 = vmul.f32 %v369, %v374
    %378 = vrot.lane.b32.xlu0 %v376, 64
    %v379 = vpop.permute.xlu0 %378
    %v381 = vadd.f32 %v142, %v379
    %v382 = vtanh.pop %v381
    %v384 = vrot.slane %v382, 4
    %v386 = vsub.f32 %v284, %v384
    %v388 = vrot.slane %v386, 4
    %389 = vrot.lane.b32.xlu0 %v388, 96
    %v390 = vpop.permute.xlu0 %389
    %v392 = vmul.f32 %v369, %v390
    %394 = vrot.lane.b32.xlu0 %v392, 32
    %v395 = vpop.permute.xlu0 %394
    %v397 = vadd.f32 %v382, %v395
    %vm398 = vcmp.gt.s32.totalorder %v165, 1
    %v399 = vsel %vm398, 1, 0
    %400 = vset.pattern.permute.xlu0 0
    %401 = vperm.xlu0 %400, %v399
    %v402 = vpop.permute.xlu0 %401
    %vm403 = vcmp.eq.s32.totalorder %v402, 1
    %v405 = vrot.slane %v397, 4
    %406 = vrot.lane.b32.xlu0 %v405, 64
    %v407 = vpop.permute.xlu0 %406
    %v410 = vsel %vm403, %v407, %v287
    %v412 = vsel %vm166, %v410, 0
    %414 = vmatprep.subr.mxu0 0.0
    %415 = vmatpush1.msra.mxu0 %v160
    %416 = vmatprep.subr.mxu0 0.0
    %417 = vmatpush1.msra.mxu0 %v161
    %418 = vmatprep.subr.mxu0 0.0
    %419 = vmatpush1.msra.mxu0 %v162
    %420 = vmatprep.subr.mxu0 0.0
    %421 = vmatpush1.msra.mxu0 %v163
    %422 = vmatprep.subr.mxu0 0.0
    %423 = vmatpush1.msra.mxu0 0.0
    %424 = vmatprep.subr.mxu0 0.0
    %425 = vmatpush1.msra.mxu0 0.0
    %426 = vmatprep.subr.mxu0 0.0
    %427 = vmatpush1.msra.mxu0 0.0
    %428 = vmatprep.subr.mxu0 0.0
    %429 = vmatpush1.msra.mxu0 0.0
    %430 = vmatprep.subr.mxu0 0.0
    %431 = vmatpush1.msra.mxu0 0.0
    %432 = vmatprep.subr.mxu0 0.0
    %433 = vmatpush1.msra.mxu0 0.0
    %434 = vmatprep.subr.mxu0 0.0
    %435 = vmatpush1.msra.mxu0 0.0
    %436 = vmatprep.subr.mxu0 0.0
    %437 = vmatpush1.msra.mxu0 0.0
    %438 = vmatprep.subr.mxu0 0.0
    %439 = vmatpush1.msra.mxu0 0.0
    %440 = vmatprep.subr.mxu0 0.0
    %441 = vmatpush1.msra.mxu0 0.0
    %442 = vmatprep.subr.mxu0 0.0
    %443 = vmatpush1.msra.mxu0 0.0
    %444 = vmatprep.subr.mxu0 0.0
    %445 = vmatpush1.msra.mxu0 0.0
    %446 = vmatprep.subr.mxu0 0.0
    %447 = vmatpush1.msra.mxu0 0.0
    %448 = vmatprep.subr.mxu0 0.0
    %449 = vmatpush1.msra.mxu0 0.0
    %450 = vmatprep.subr.mxu0 0.0
    %451 = vmatpush1.msra.mxu0 0.0
    %452 = vmatprep.subr.mxu0 0.0
    %453 = vmatpush1.msra.mxu0 0.0
    %454 = vmatprep.subr.mxu0 0.0
    %455 = vmatpush1.msra.mxu0 0.0
    %456 = vmatprep.subr.mxu0 0.0
    %457 = vmatpush1.msra.mxu0 0.0
    %458 = vmatprep.subr.mxu0 0.0
    %459 = vmatpush1.msra.mxu0 0.0
    %460 = vmatprep.subr.mxu0 0.0
    %461 = vmatpush1.msra.mxu0 0.0
    %462 = vmatprep.subr.mxu0 0.0
    %463 = vmatpush1.msra.mxu0 0.0
    %464 = vmatprep.subr.mxu0 0.0
    %465 = vmatpush1.msra.mxu0 0.0
    %466 = vmatprep.subr.mxu0 0.0
    %467 = vmatpush1.msra.mxu0 0.0
    %468 = vmatprep.subr.mxu0 0.0
    %469 = vmatpush1.msra.mxu0 0.0
    %470 = vmatprep.subr.mxu0 0.0
    %471 = vmatpush1.msra.mxu0 0.0
    %472 = vmatprep.subr.mxu0 0.0
    %473 = vmatpush1.msra.mxu0 0.0
    %474 = vmatprep.subr.mxu0 0.0
    %475 = vmatpush1.msra.mxu0 0.0
    %476 = vmatprep.subr.mxu0 0.0
    %477 = vmatpush1.msra.mxu0 0.0
    %478 = vmatprep.mubr.f32.mxu0 0.0
    %479 = vmatmul.mubr.f32.gmra.mrb[0].mxu0 %v412
    %v480 = vpop.f32.mrb[0].mxu0
    %v481 = vadd.f32 0.0, %v480
    %v482 = vpop.f32.mrb[0].mxu0
    %483 = vdwg.mxu0
    %v484 = vadd.f32 %v147, %v481
    %v485 = vxor.u32 %v484, 2147483648
    %v486 = vmul.f32 %v485, 1.442695
    %v487 = vpow.pop %v486
    %v488 = vadd.f32 %v487, 1.0
    %v489 = vrcp.pop %v488
    %v490 = vmul.f32 1.0, %v489
    %v491 = vadd.f32 %v481, %v253
    %493 = vrot.lane.b32.xlu0 %v491, 64
    %v494 = vpop.permute.xlu0 %493
    %v496 = vmul.f32 %v490, %v494
    %498 = vrot.lane.b32.xlu0 %v496, 64
    %v499 = vpop.permute.xlu0 %498
    %v501 = vadd.f32 %v147, %v499
    %v502 = vtanh.pop %v501
    %504 = vrot.lane.b32.xlu0 %v502, 64
    %v505 = vpop.permute.xlu0 %504
    %v507 = vsub.f32 %v410, %v505
    %509 = vrot.lane.b32.xlu0 %v507, 32
    %v510 = vpop.permute.xlu0 %509
    %v512 = vmul.f32 %v490, %v510
    %514 = vrot.lane.b32.xlu0 %v512, 32
    %v515 = vpop.permute.xlu0 %514
    %v517 = vadd.f32 %v502, %v515
    %vm518 = vcmp.gt.s32.totalorder %v165, 2
    %v519 = vsel %vm518, 1, 0
    %520 = vset.pattern.permute.xlu0 0
    %521 = vperm.xlu0 %520, %v519
    %v522 = vpop.permute.xlu0 %521
    %vm523 = vcmp.eq.s32.totalorder %v522, 1
    %524 = vrot.lane.b32.xlu0 %v410, 64
    %v525 = vpop.permute.xlu0 %524
    %v527 = vsel %vm523, %v517, %v525
    %529 = vrot.lane.b32.xlu0 %v527, 64
    %v530 = vpop.permute.xlu0 %529
    %v531 = vsel %vm166, %v530, 0
    %533 = vmatprep.subr.mxu0 0.0
    %534 = vmatpush1.msra.mxu0 %v160
    %535 = vmatprep.subr.mxu0 0.0
    %536 = vmatpush1.msra.mxu0 %v161
    %537 = vmatprep.subr.mxu0 0.0
    %538 = vmatpush1.msra.mxu0 %v162
    %539 = vmatprep.subr.mxu0 0.0
    %540 = vmatpush1.msra.mxu0 %v163
    %541 = vmatprep.subr.mxu0 0.0
    %542 = vmatpush1.msra.mxu0 0.0
    %543 = vmatprep.subr.mxu0 0.0
    %544 = vmatpush1.msra.mxu0 0.0
    %545 = vmatprep.subr.mxu0 0.0
    %546 = vmatpush1.msra.mxu0 0.0
    %547 = vmatprep.subr.mxu0 0.0
    %548 = vmatpush1.msra.mxu0 0.0
    %549 = vmatprep.subr.mxu0 0.0
    %550 = vmatpush1.msra.mxu0 0.0
    %551 = vmatprep.subr.mxu0 0.0
    %552 = vmatpush1.msra.mxu0 0.0
    %553 = vmatprep.subr.mxu0 0.0
    %554 = vmatpush1.msra.mxu0 0.0
    %555 = vmatprep.subr.mxu0 0.0
    %556 = vmatpush1.msra.mxu0 0.0
    %557 = vmatprep.subr.mxu0 0.0
    %558 = vmatpush1.msra.mxu0 0.0
    %559 = vmatprep.subr.mxu0 0.0
    %560 = vmatpush1.msra.mxu0 0.0
    %561 = vmatprep.subr.mxu0 0.0
    %562 = vmatpush1.msra.mxu0 0.0
    %563 = vmatprep.subr.mxu0 0.0
    %564 = vmatpush1.msra.mxu0 0.0
    %565 = vmatprep.subr.mxu0 0.0
    %566 = vmatpush1.msra.mxu0 0.0
    %567 = vmatprep.subr.mxu0 0.0
    %568 = vmatpush1.msra.mxu0 0.0
    %569 = vmatprep.subr.mxu0 0.0
    %570 = vmatpush1.msra.mxu0 0.0
    %571 = vmatprep.subr.mxu0 0.0
    %572 = vmatpush1.msra.mxu0 0.0
    %573 = vmatprep.subr.mxu0 0.0
    %574 = vmatpush1.msra.mxu0 0.0
    %575 = vmatprep.subr.mxu0 0.0
    %576 = vmatpush1.msra.mxu0 0.0
    %577 = vmatprep.subr.mxu0 0.0
    %578 = vmatpush1.msra.mxu0 0.0
    %579 = vmatprep.subr.mxu0 0.0
    %580 = vmatpush1.msra.mxu0 0.0
    %581 = vmatprep.subr.mxu0 0.0
    %582 = vmatpush1.msra.mxu0 0.0
    %583 = vmatprep.subr.mxu0 0.0
    %584 = vmatpush1.msra.mxu0 0.0
    %585 = vmatprep.subr.mxu0 0.0
    %586 = vmatpush1.msra.mxu0 0.0
    %587 = vmatprep.subr.mxu0 0.0
    %588 = vmatpush1.msra.mxu0 0.0
    %589 = vmatprep.subr.mxu0 0.0
    %590 = vmatpush1.msra.mxu0 0.0
    %591 = vmatprep.subr.mxu0 0.0
    %592 = vmatpush1.msra.mxu0 0.0
    %593 = vmatprep.subr.mxu0 0.0
    %594 = vmatpush1.msra.mxu0 0.0
    %595 = vmatprep.subr.mxu0 0.0
    %596 = vmatpush1.msra.mxu0 0.0
    %597 = vmatprep.mubr.f32.mxu0 0.0
    %598 = vmatmul.mubr.f32.gmra.mrb[0].mxu0 %v531
    %v599 = vpop.f32.mrb[0].mxu0
    %v600 = vadd.f32 0.0, %v599
    %v601 = vpop.f32.mrb[0].mxu0
    %602 = vdwg.mxu0
    %v604 = vrot.slane %v600, 4
    %v606 = vadd.f32 %v147, %v604
    %v607 = vxor.u32 %v606, 2147483648
    %v608 = vmul.f32 %v607, 1.442695
    %v609 = vpow.pop %v608
    %v610 = vadd.f32 %v609, 1.0
    %v611 = vrcp.pop %v610
    %v612 = vmul.f32 1.0, %v611
    %v613 = vadd.f32 %v600, %v253
    %v615 = vrot.slane %v613, 4
    %616 = vrot.lane.b32.xlu0 %v615, 64
    %v617 = vpop.permute.xlu0 %616
    %v619 = vmul.f32 %v612, %v617
    %621 = vrot.lane.b32.xlu0 %v619, 64
    %v622 = vpop.permute.xlu0 %621
    %v624 = vadd.f32 %v147, %v622
    %v625 = vtanh.pop %v624
    %v627 = vrot.slane %v625, 4
    %v629 = vsub.f32 %v527, %v627
    %v631 = vrot.slane %v629, 4
    %632 = vrot.lane.b32.xlu0 %v631, 96
    %v633 = vpop.permute.xlu0 %632
    %v635 = vmul.f32 %v612, %v633
    %637 = vrot.lane.b32.xlu0 %v635, 32
    %v638 = vpop.permute.xlu0 %637
    %v640 = vadd.f32 %v625, %v638
    %vm641 = vcmp.gt.s32.totalorder %v165, 3
    %v642 = vsel %vm641, 1, 0
    %643 = vset.pattern.permute.xlu0 0
    %644 = vperm.xlu0 %643, %v642
    %v645 = vpop.permute.xlu0 %644
    %vm646 = vcmp.eq.s32.totalorder %v645, 1
    %v648 = vrot.slane %v640, 4
    %649 = vrot.lane.b32.xlu0 %v648, 64
    %v650 = vpop.permute.xlu0 %649
    %v653 = vsel %vm646, %v650, %v530
    %v655 = vsel %vm166, %v653, 0
    %657 = vmatprep.subr.mxu0 0.0
    %658 = vmatpush1.msra.mxu0 %v160
    %659 = vmatprep.subr.mxu0 0.0
    %660 = vmatpush1.msra.mxu0 %v161
    %661 = vmatprep.subr.mxu0 0.0
    %662 = vmatpush1.msra.mxu0 %v162
    %663 = vmatprep.subr.mxu0 0.0
    %664 = vmatpush1.msra.mxu0 %v163
    %665 = vmatprep.subr.mxu0 0.0
    %666 = vmatpush1.msra.mxu0 0.0
    %667 = vmatprep.subr.mxu0 0.0
    %668 = vmatpush1.msra.mxu0 0.0
    %669 = vmatprep.subr.mxu0 0.0
    %670 = vmatpush1.msra.mxu0 0.0
    %671 = vmatprep.subr.mxu0 0.0
    %672 = vmatpush1.msra.mxu0 0.0
    %673 = vmatprep.subr.mxu0 0.0
    %674 = vmatpush1.msra.mxu0 0.0
    %675 = vmatprep.subr.mxu0 0.0
    %676 = vmatpush1.msra.mxu0 0.0
    %677 = vmatprep.subr.mxu0 0.0
    %678 = vmatpush1.msra.mxu0 0.0
    %679 = vmatprep.subr.mxu0 0.0
    %680 = vmatpush1.msra.mxu0 0.0
    %681 = vmatprep.subr.mxu0 0.0
    %682 = vmatpush1.msra.mxu0 0.0
    %683 = vmatprep.subr.mxu0 0.0
    %684 = vmatpush1.msra.mxu0 0.0
    %685 = vmatprep.subr.mxu0 0.0
    %686 = vmatpush1.msra.mxu0 0.0
    %687 = vmatprep.subr.mxu0 0.0
    %688 = vmatpush1.msra.mxu0 0.0
    %689 = vmatprep.subr.mxu0 0.0
    %690 = vmatpush1.msra.mxu0 0.0
    %691 = vmatprep.subr.mxu0 0.0
    %692 = vmatpush1.msra.mxu0 0.0
    %693 = vmatprep.subr.mxu0 0.0
    %694 = vmatpush1.msra.mxu0 0.0
    %695 = vmatprep.subr.mxu0 0.0
    %696 = vmatpush1.msra.mxu0 0.0
    %697 = vmatprep.subr.mxu0 0.0
    %698 = vmatpush1.msra.mxu0 0.0
    %699 = vmatprep.subr.mxu0 0.0
    %700 = vmatpush1.msra.mxu0 0.0
    %701 = vmatprep.subr.mxu0 0.0
    %702 = vmatpush1.msra.mxu0 0.0
    %703 = vmatprep.subr.mxu0 0.0
    %704 = vmatpush1.msra.mxu0 0.0
    %705 = vmatprep.subr.mxu0 0.0
    %706 = vmatpush1.msra.mxu0 0.0
    %707 = vmatprep.subr.mxu0 0.0
    %708 = vmatpush1.msra.mxu0 0.0
    %709 = vmatprep.subr.mxu0 0.0
    %710 = vmatpush1.msra.mxu0 0.0
    %711 = vmatprep.subr.mxu0 0.0
    %712 = vmatpush1.msra.mxu0 0.0
    %713 = vmatprep.subr.mxu0 0.0
    %714 = vmatpush1.msra.mxu0 0.0
    %715 = vmatprep.subr.mxu0 0.0
    %716 = vmatpush1.msra.mxu0 0.0
    %717 = vmatprep.subr.mxu0 0.0
    %718 = vmatpush1.msra.mxu0 0.0
    %719 = vmatprep.subr.mxu0 0.0
    %720 = vmatpush1.msra.mxu0 0.0
    %721 = vmatprep.mubr.f32.mxu0 0.0
    %722 = vmatmul.mubr.f32.gmra.mrb[0].mxu0 %v655
    %v723 = vpop.f32.mrb[0].mxu0
    %v724 = vadd.f32 0.0, %v723
    %v725 = vpop.f32.mrb[0].mxu0
    %726 = vdwg.mxu0
    %v727 = vadd.f32 %v152, %v724
    %v728 = vxor.u32 %v727, 2147483648
    %v729 = vmul.f32 %v728, 1.442695
    %v730 = vpow.pop %v729
    %v731 = vadd.f32 %v730, 1.0
    %v732 = vrcp.pop %v731
    %v733 = vmul.f32 1.0, %v732
    %v734 = vadd.f32 %v724, %v253
    %736 = vrot.lane.b32.xlu0 %v734, 64
    %v737 = vpop.permute.xlu0 %736
    %v739 = vmul.f32 %v733, %v737
    %741 = vrot.lane.b32.xlu0 %v739, 64
    %v742 = vpop.permute.xlu0 %741
    %v744 = vadd.f32 %v152, %v742
    %v745 = vtanh.pop %v744
    %747 = vrot.lane.b32.xlu0 %v745, 64
    %v748 = vpop.permute.xlu0 %747
    %v750 = vsub.f32 %v653, %v748
    %752 = vrot.lane.b32.xlu0 %v750, 32
    %v753 = vpop.permute.xlu0 %752
    %v755 = vmul.f32 %v733, %v753
    %757 = vrot.lane.b32.xlu0 %v755, 32
    %v758 = vpop.permute.xlu0 %757
    %v760 = vadd.f32 %v745, %v758
    %vm761 = vcmp.gt.s32.totalorder %v165, 4
    %v762 = vsel %vm761, 1, 0
    %763 = vset.pattern.permute.xlu0 0
    %764 = vperm.xlu0 %763, %v762
    %v765 = vpop.permute.xlu0 %764
    %vm766 = vcmp.eq.s32.totalorder %v765, 1
    %767 = vrot.lane.b32.xlu0 %v653, 64
    %v768 = vpop.permute.xlu0 %767
    %v770 = vsel %vm766, %v760, %v768
    %772 = vrot.lane.b32.xlu0 %v770, 64
    %v773 = vpop.permute.xlu0 %772
    %v774 = vsel %vm166, %v773, 0
    %776 = vmatprep.subr.mxu0 0.0
    %777 = vmatpush1.msra.mxu0 %v160
    %778 = vmatprep.subr.mxu0 0.0
    %779 = vmatpush1.msra.mxu0 %v161
    %780 = vmatprep.subr.mxu0 0.0
    %781 = vmatpush1.msra.mxu0 %v162
    %782 = vmatprep.subr.mxu0 0.0
    %783 = vmatpush1.msra.mxu0 %v163
    %784 = vmatprep.subr.mxu0 0.0
    %785 = vmatpush1.msra.mxu0 0.0
    %786 = vmatprep.subr.mxu0 0.0
    %787 = vmatpush1.msra.mxu0 0.0
    %788 = vmatprep.subr.mxu0 0.0
    %789 = vmatpush1.msra.mxu0 0.0
    %790 = vmatprep.subr.mxu0 0.0
    %791 = vmatpush1.msra.mxu0 0.0
    %792 = vmatprep.subr.mxu0 0.0
    %793 = vmatpush1.msra.mxu0 0.0
    %794 = vmatprep.subr.mxu0 0.0
    %795 = vmatpush1.msra.mxu0 0.0
    %796 = vmatprep.subr.mxu0 0.0
    %797 = vmatpush1.msra.mxu0 0.0
    %798 = vmatprep.subr.mxu0 0.0
    %799 = vmatpush1.msra.mxu0 0.0
    %800 = vmatprep.subr.mxu0 0.0
    %801 = vmatpush1.msra.mxu0 0.0
    %802 = vmatprep.subr.mxu0 0.0
    %803 = vmatpush1.msra.mxu0 0.0
    %804 = vmatprep.subr.mxu0 0.0
    %805 = vmatpush1.msra.mxu0 0.0
    %806 = vmatprep.subr.mxu0 0.0
    %807 = vmatpush1.msra.mxu0 0.0
    %808 = vmatprep.subr.mxu0 0.0
    %809 = vmatpush1.msra.mxu0 0.0
    %810 = vmatprep.subr.mxu0 0.0
    %811 = vmatpush1.msra.mxu0 0.0
    %812 = vmatprep.subr.mxu0 0.0
    %813 = vmatpush1.msra.mxu0 0.0
    %814 = vmatprep.subr.mxu0 0.0
    %815 = vmatpush1.msra.mxu0 0.0
    %816 = vmatprep.subr.mxu0 0.0
    %817 = vmatpush1.msra.mxu0 0.0
    %818 = vmatprep.subr.mxu0 0.0
    %819 = vmatpush1.msra.mxu0 0.0
    %820 = vmatprep.subr.mxu0 0.0
    %821 = vmatpush1.msra.mxu0 0.0
    %822 = vmatprep.subr.mxu0 0.0
    %823 = vmatpush1.msra.mxu0 0.0
    %824 = vmatprep.subr.mxu0 0.0
    %825 = vmatpush1.msra.mxu0 0.0
    %826 = vmatprep.subr.mxu0 0.0
    %827 = vmatpush1.msra.mxu0 0.0
    %828 = vmatprep.subr.mxu0 0.0
    %829 = vmatpush1.msra.mxu0 0.0
    %830 = vmatprep.subr.mxu0 0.0
    %831 = vmatpush1.msra.mxu0 0.0
    %832 = vmatprep.subr.mxu0 0.0
    %833 = vmatpush1.msra.mxu0 0.0
    %834 = vmatprep.subr.mxu0 0.0
    %835 = vmatpush1.msra.mxu0 0.0
    %836 = vmatprep.subr.mxu0 0.0
    %837 = vmatpush1.msra.mxu0 0.0
    %838 = vmatprep.subr.mxu0 0.0
    %839 = vmatpush1.msra.mxu0 0.0
    %840 = vmatprep.mubr.f32.mxu0 0.0
    %841 = vmatmul.mubr.f32.gmra.mrb[0].mxu0 %v774
    %v842 = vpop.f32.mrb[0].mxu0
    %v843 = vadd.f32 0.0, %v842
    %v844 = vpop.f32.mrb[0].mxu0
    %845 = vdwg.mxu0
    %v847 = vrot.slane %v843, 4
    %v849 = vadd.f32 %v152, %v847
    %v850 = vxor.u32 %v849, 2147483648
    %v851 = vmul.f32 %v850, 1.442695
    %v852 = vpow.pop %v851
    %v853 = vadd.f32 %v852, 1.0
    %v854 = vrcp.pop %v853
    %v855 = vmul.f32 1.0, %v854
    %v856 = vadd.f32 %v843, %v253
    %v858 = vrot.slane %v856, 4
    %859 = vrot.lane.b32.xlu0 %v858, 64
    %v860 = vpop.permute.xlu0 %859
    %v862 = vmul.f32 %v855, %v860
    %864 = vrot.lane.b32.xlu0 %v862, 64
    %v865 = vpop.permute.xlu0 %864
    %v867 = vadd.f32 %v152, %v865
    %v868 = vtanh.pop %v867
    %v870 = vrot.slane %v868, 4
    %v872 = vsub.f32 %v770, %v870
    %v874 = vrot.slane %v872, 4
    %875 = vrot.lane.b32.xlu0 %v874, 96
    %v876 = vpop.permute.xlu0 %875
    %v878 = vmul.f32 %v855, %v876
    %880 = vrot.lane.b32.xlu0 %v878, 32
    %v881 = vpop.permute.xlu0 %880
    %v883 = vadd.f32 %v868, %v881
    %vm884 = vcmp.gt.s32.totalorder %v165, 5
    %v885 = vsel %vm884, 1, 0
    %886 = vset.pattern.permute.xlu0 0
    %887 = vperm.xlu0 %886, %v885
    %v888 = vpop.permute.xlu0 %887
    %vm889 = vcmp.eq.s32.totalorder %v888, 1
    %v891 = vrot.slane %v883, 4
    %892 = vrot.lane.b32.xlu0 %v891, 64
    %v893 = vpop.permute.xlu0 %892
    %v896 = vsel %vm889, %v893, %v773
    %v898 = vsel %vm166, %v896, 0
    %900 = vmatprep.subr.mxu0 0.0
    %901 = vmatpush1.msra.mxu0 %v160
    %902 = vmatprep.subr.mxu0 0.0
    %903 = vmatpush1.msra.mxu0 %v161
    %904 = vmatprep.subr.mxu0 0.0
    %905 = vmatpush1.msra.mxu0 %v162
    %906 = vmatprep.subr.mxu0 0.0
    %907 = vmatpush1.msra.mxu0 %v163
    %908 = vmatprep.subr.mxu0 0.0
    %909 = vmatpush1.msra.mxu0 0.0
    %910 = vmatprep.subr.mxu0 0.0
    %911 = vmatpush1.msra.mxu0 0.0
    %912 = vmatprep.subr.mxu0 0.0
    %913 = vmatpush1.msra.mxu0 0.0
    %914 = vmatprep.subr.mxu0 0.0
    %915 = vmatpush1.msra.mxu0 0.0
    %916 = vmatprep.subr.mxu0 0.0
    %917 = vmatpush1.msra.mxu0 0.0
    %918 = vmatprep.subr.mxu0 0.0
    %919 = vmatpush1.msra.mxu0 0.0
    %920 = vmatprep.subr.mxu0 0.0
    %921 = vmatpush1.msra.mxu0 0.0
    %922 = vmatprep.subr.mxu0 0.0
    %923 = vmatpush1.msra.mxu0 0.0
    %924 = vmatprep.subr.mxu0 0.0
    %925 = vmatpush1.msra.mxu0 0.0
    %926 = vmatprep.subr.mxu0 0.0
    %927 = vmatpush1.msra.mxu0 0.0
    %928 = vmatprep.subr.mxu0 0.0
    %929 = vmatpush1.msra.mxu0 0.0
    %930 = vmatprep.subr.mxu0 0.0
    %931 = vmatpush1.msra.mxu0 0.0
    %932 = vmatprep.subr.mxu0 0.0
    %933 = vmatpush1.msra.mxu0 0.0
    %934 = vmatprep.subr.mxu0 0.0
    %935 = vmatpush1.msra.mxu0 0.0
    %936 = vmatprep.subr.mxu0 0.0
    %937 = vmatpush1.msra.mxu0 0.0
    %938 = vmatprep.subr.mxu0 0.0
    %939 = vmatpush1.msra.mxu0 0.0
    %940 = vmatprep.subr.mxu0 0.0
    %941 = vmatpush1.msra.mxu0 0.0
    %942 = vmatprep.subr.mxu0 0.0
    %943 = vmatpush1.msra.mxu0 0.0
    %944 = vmatprep.subr.mxu0 0.0
    %945 = vmatpush1.msra.mxu0 0.0
    %946 = vmatprep.subr.mxu0 0.0
    %947 = vmatpush1.msra.mxu0 0.0
    %948 = vmatprep.subr.mxu0 0.0
    %949 = vmatpush1.msra.mxu0 0.0
    %950 = vmatprep.subr.mxu0 0.0
    %951 = vmatpush1.msra.mxu0 0.0
    %952 = vmatprep.subr.mxu0 0.0
    %953 = vmatpush1.msra.mxu0 0.0
    %954 = vmatprep.subr.mxu0 0.0
    %955 = vmatpush1.msra.mxu0 0.0
    %956 = vmatprep.subr.mxu0 0.0
    %957 = vmatpush1.msra.mxu0 0.0
    %958 = vmatprep.subr.mxu0 0.0
    %959 = vmatpush1.msra.mxu0 0.0
    %960 = vmatprep.subr.mxu0 0.0
    %961 = vmatpush1.msra.mxu0 0.0
    %962 = vmatprep.subr.mxu0 0.0
    %963 = vmatpush1.msra.mxu0 0.0
    %964 = vmatprep.mubr.f32.mxu0 0.0
    %965 = vmatmul.mubr.f32.gmra.mrb[0].mxu0 %v898
    %v966 = vpop.f32.mrb[0].mxu0
    %v967 = vadd.f32 0.0, %v966
    %v968 = vpop.f32.mrb[0].mxu0
    %969 = vdwg.mxu0
    %v970 = vadd.f32 %v157, %v967
    %v971 = vxor.u32 %v970, 2147483648
    %v972 = vmul.f32 %v971, 1.442695
    %v973 = vpow.pop %v972
    %v974 = vadd.f32 %v973, 1.0
    %v975 = vrcp.pop %v974
    %v976 = vmul.f32 1.0, %v975
    %v977 = vadd.f32 %v967, %v253
    %979 = vrot.lane.b32.xlu0 %v977, 64
    %v980 = vpop.permute.xlu0 %979
    %v982 = vmul.f32 %v976, %v980
    %984 = vrot.lane.b32.xlu0 %v982, 64
    %v985 = vpop.permute.xlu0 %984
    %v987 = vadd.f32 %v157, %v985
    %v988 = vtanh.pop %v987
    %990 = vrot.lane.b32.xlu0 %v988, 64
    %v991 = vpop.permute.xlu0 %990
    %v993 = vsub.f32 %v896, %v991
    %995 = vrot.lane.b32.xlu0 %v993, 32
    %v996 = vpop.permute.xlu0 %995
    %v998 = vmul.f32 %v976, %v996
    %1000 = vrot.lane.b32.xlu0 %v998, 32
    %v1001 = vpop.permute.xlu0 %1000
    %v1003 = vadd.f32 %v988, %v1001
    %vm1004 = vcmp.gt.s32.totalorder %v165, 6
    %v1005 = vsel %vm1004, 1, 0
    %1006 = vset.pattern.permute.xlu0 0
    %1007 = vperm.xlu0 %1006, %v1005
    %v1008 = vpop.permute.xlu0 %1007
    %vm1009 = vcmp.eq.s32.totalorder %v1008, 1
    %1010 = vrot.lane.b32.xlu0 %v896, 64
    %v1011 = vpop.permute.xlu0 %1010
    %v1013 = vsel %vm1009, %v1003, %v1011
    %1015 = vrot.lane.b32.xlu0 %v1013, 64
    %v1016 = vpop.permute.xlu0 %1015
    %v1017 = vsel %vm166, %v1016, 0
    %1019 = vmatprep.subr.mxu0 0.0
    %1020 = vmatpush1.msra.mxu0 %v160
    %1021 = vmatprep.subr.mxu0 0.0
    %1022 = vmatpush1.msra.mxu0 %v161
    %1023 = vmatprep.subr.mxu0 0.0
    %1024 = vmatpush1.msra.mxu0 %v162
    %1025 = vmatprep.subr.mxu0 0.0
    %1026 = vmatpush1.msra.mxu0 %v163
    %1027 = vmatprep.subr.mxu0 0.0
    %1028 = vmatpush1.msra.mxu0 0.0
    %1029 = vmatprep.subr.mxu0 0.0
    %1030 = vmatpush1.msra.mxu0 0.0
    %1031 = vmatprep.subr.mxu0 0.0
    %1032 = vmatpush1.msra.mxu0 0.0
    %1033 = vmatprep.subr.mxu0 0.0
    %1034 = vmatpush1.msra.mxu0 0.0
    %1035 = vmatprep.subr.mxu0 0.0
    %1036 = vmatpush1.msra.mxu0 0.0
    %1037 = vmatprep.subr.mxu0 0.0
    %1038 = vmatpush1.msra.mxu0 0.0
    %1039 = vmatprep.subr.mxu0 0.0
    %1040 = vmatpush1.msra.mxu0 0.0
    %1041 = vmatprep.subr.mxu0 0.0
    %1042 = vmatpush1.msra.mxu0 0.0
    %1043 = vmatprep.subr.mxu0 0.0
    %1044 = vmatpush1.msra.mxu0 0.0
    %1045 = vmatprep.subr.mxu0 0.0
    %1046 = vmatpush1.msra.mxu0 0.0
    %1047 = vmatprep.subr.mxu0 0.0
    %1048 = vmatpush1.msra.mxu0 0.0
    %1049 = vmatprep.subr.mxu0 0.0
    %1050 = vmatpush1.msra.mxu0 0.0
    %1051 = vmatprep.subr.mxu0 0.0
    %1052 = vmatpush1.msra.mxu0 0.0
    %1053 = vmatprep.subr.mxu0 0.0
    %1054 = vmatpush1.msra.mxu0 0.0
    %1055 = vmatprep.subr.mxu0 0.0
    %1056 = vmatpush1.msra.mxu0 0.0
    %1057 = vmatprep.subr.mxu0 0.0
    %1058 = vmatpush1.msra.mxu0 0.0
    %1059 = vmatprep.subr.mxu0 0.0
    %1060 = vmatpush1.msra.mxu0 0.0
    %1061 = vmatprep.subr.mxu0 0.0
    %1062 = vmatpush1.msra.mxu0 0.0
    %1063 = vmatprep.subr.mxu0 0.0
    %1064 = vmatpush1.msra.mxu0 0.0
    %1065 = vmatprep.subr.mxu0 0.0
    %1066 = vmatpush1.msra.mxu0 0.0
    %1067 = vmatprep.subr.mxu0 0.0
    %1068 = vmatpush1.msra.mxu0 0.0
    %1069 = vmatprep.subr.mxu0 0.0
    %1070 = vmatpush1.msra.mxu0 0.0
    %1071 = vmatprep.subr.mxu0 0.0
    %1072 = vmatpush1.msra.mxu0 0.0
    %1073 = vmatprep.subr.mxu0 0.0
    %1074 = vmatpush1.msra.mxu0 0.0
    %1075 = vmatprep.subr.mxu0 0.0
    %1076 = vmatpush1.msra.mxu0 0.0
    %1077 = vmatprep.subr.mxu0 0.0
    %1078 = vmatpush1.msra.mxu0 0.0
    %1079 = vmatprep.subr.mxu0 0.0
    %1080 = vmatpush1.msra.mxu0 0.0
    %1081 = vmatprep.subr.mxu0 0.0
    %1082 = vmatpush1.msra.mxu0 0.0
    %1083 = vmatprep.mubr.f32.mxu0 0.0
    %1084 = vmatmul.mubr.f32.gmra.mrb[0].mxu0 %v1017
    %v1085 = vpop.f32.mrb[0].mxu0
    %v1086 = vadd.f32 0.0, %v1085
    %v1087 = vpop.f32.mrb[0].mxu0
    %1088 = vdwg.mxu0
    %v1090 = vrot.slane %v1086, 4
    %v1092 = vadd.f32 %v157, %v1090
    %v1093 = vxor.u32 %v1092, 2147483648
    %v1094 = vmul.f32 %v1093, 1.442695
    %v1095 = vpow.pop %v1094
    %v1096 = vadd.f32 %v1095, 1.0
    %v1097 = vrcp.pop %v1096
    %v1098 = vmul.f32 1.0, %v1097
    %v1099 = vadd.f32 %v1086, %v253
    %v1101 = vrot.slane %v1099, 4
    %1102 = vrot.lane.b32.xlu0 %v1101, 64
    %v1103 = vpop.permute.xlu0 %1102
    %v1105 = vmul.f32 %v1098, %v1103
    %1107 = vrot.lane.b32.xlu0 %v1105, 64
    %v1108 = vpop.permute.xlu0 %1107
    %v1110 = vadd.f32 %v157, %v1108
    %v1111 = vtanh.pop %v1110
    %v1113 = vrot.slane %v1111, 4
    %v1115 = vsub.f32 %v1013, %v1113
    %v1117 = vrot.slane %v1115, 4
    %1118 = vrot.lane.b32.xlu0 %v1117, 96
    %v1119 = vpop.permute.xlu0 %1118
    %v1121 = vmul.f32 %v1098, %v1119
    %1123 = vrot.lane.b32.xlu0 %v1121, 32
    %v1124 = vpop.permute.xlu0 %1123
    %v1126 = vadd.f32 %v1111, %v1124
    %vm1127 = vcmp.gt.s32.totalorder %v165, 7
    %v1128 = vsel %vm1127, 1, 0
    %1129 = vset.pattern.permute.xlu0 0
    %1130 = vperm.xlu0 %1129, %v1128
    %v1131 = vpop.permute.xlu0 %1130
    %vm1132 = vcmp.eq.s32.totalorder %v1131, 1
    %v1134 = vrot.slane %v1126, 4
    %1135 = vrot.lane.b32.xlu0 %v1134, 64
    %v1136 = vpop.permute.xlu0 %1135
    %v1139 = vsel %vm1132, %v1136, %v1016
    %vm1140 = vcmask 257024
    %1141 = vst.msk [vmem:[#allocation2] sm:$0xf] %vm1140, %v1139
    // Predicated region
    $region22: #{sentence_encode.1} parent=1 // pred_check
      _
    $region23: #{sentence_encode.1} parent=1 // pred_check_branch
      %1143 = sbr.rel (0) target = $region25
    $region24: #{sentence_encode.1} parent=1 // pred_region
      %s1145 = ssub.s32 64, 64
      %1146 = vsyncadd [#allocation3], %s1145
      %s1148 = sshll.u32 [#allocation2], 4
      %s1149 = int_to_ptr.vmem [resolvable:$true] %s1148
      %1151 = dma.vmem_to_hbm [thread:$0]  %s1149, 64, %s5, [#allocation3]
    $region25: #{sentence_encode.1} parent=1 // pred_fallthru
      _
    // Predicated region
    $region26: #{sentence_encode.1} parent=1 // pred_check
      _
    $region27: #{sentence_encode.1} parent=1 // pred_check_branch
      %1153 = sbr.rel (0) target = $region29
    $region28: #{sentence_encode.1} parent=1 // pred_region
      %1154 = dma.done [#allocation3], 64
    $region29: #{sentence_encode.1} parent=1 // pred_fallthru
      _
    %1155 = vsyncpa [#allocation3], 1

</llo_original>
